<compile_context>
chip_gen: v5e
topology: v5e:2x2
jax: 0.10.0
libtpu: 0.0.40
codegen_flags: <defaults>
</compile_context>

<pallas_src>
import jax
import jax.numpy as jnp
from jax.experimental import pallas as pl
from jax.experimental.pallas import tpu as pltpu

IN_F, H1, H2, H3, OUT_F = 784, 512, 256, 128, 10
N_PAD = 128       # padded output lanes for the final layer (lane-dense store)
TB_MAX = 1024     # rows per grid step: ~85%+ of HBM roofline per the tile sweep,
                  # and fits v5e (16->32 MiB scoped) / v7x (64 MiB physical) VMEM.


def mlp_kernel(x_ref, w1_ref, b1_ref, w2_ref, b2_ref,
               w3_ref, b3_ref, w4_ref, b4_ref, o_ref):
    # f32 -> bf16 cast happens in-kernel (MXU-native operands, f32 accumulation).
    x = x_ref[...].astype(jnp.bfloat16)
    # Layer 1 + ReLU (bias + ReLU epilogue in f32)
    h = jnp.dot(x, w1_ref[...], preferred_element_type=jnp.float32)
    h = jnp.maximum(h + b1_ref[...], 0.0)
    # Layer 2 + ReLU
    h = jnp.dot(h.astype(jnp.bfloat16), w2_ref[...],
                preferred_element_type=jnp.float32)
    h = jnp.maximum(h + b2_ref[...], 0.0)
    # Layer 3 + ReLU
    h = jnp.dot(h.astype(jnp.bfloat16), w3_ref[...],
                preferred_element_type=jnp.float32)
    h = jnp.maximum(h + b3_ref[...], 0.0)
    # Layer 4 (no activation), padded to 128 output lanes (cols 10..127 are zero weights)
    out = jnp.dot(h.astype(jnp.bfloat16), w4_ref[...],
                  preferred_element_type=jnp.float32)
    o_ref[...] = (out + b4_ref[...]).astype(o_ref.dtype)


def _round_up(n, m):
    return (n + m - 1) // m * m


def _choose_tb(batch, tb_max=TB_MAX):
    """Batch tile: multiple of 8 (sublanes), capped at tb_max, and chosen so the
    grid has >= 2 steps when the batch allows it (both v7x TensorCores get work)."""
    if batch <= 8:
        return 8
    half = _round_up((batch + 1) // 2, 8)
    return min(tb_max, half)


def prepare_params(params):
    """One-time parameter prep (call once, reuse): bf16 weights, f32 biases,
    last layer zero-padded 10 -> 128 output lanes."""
    w4 = jnp.zeros((H3, N_PAD), jnp.bfloat16).at[:, :OUT_F].set(
        params["w4"].astype(jnp.bfloat16))
    b4 = jnp.zeros((1, N_PAD), jnp.float32).at[:, :OUT_F].set(
        params["b4"].astype(jnp.float32))
    return dict(
        w1=params["w1"].astype(jnp.bfloat16), b1=params["b1"].astype(jnp.float32),
        w2=params["w2"].astype(jnp.bfloat16), b2=params["b2"].astype(jnp.float32),
        w3=params["w3"].astype(jnp.bfloat16), b3=params["b3"].astype(jnp.float32),
        w4=w4, b4=b4,
    )


def simple_nn_forward(x, prepared, *, tb_max=TB_MAX):
    """x: (B, 784) float32 (or bfloat16).  prepared: output of prepare_params."""
    B = x.shape[0]
    tb = _choose_tb(B, tb_max)
    grid = (pl.cdiv(B, tb),)

    # Constant block index -> weights/biases stay VMEM-resident across the batch grid.
    const = lambda a: pl.BlockSpec(a.shape, lambda i: (0,) * a.ndim)

    out = pl.pallas_call(
        mlp_kernel,
        out_shape=jax.ShapeDtypeStruct((B, N_PAD), jnp.float32),
        grid_spec=pltpu.PrefetchScalarGridSpec(
            num_scalar_prefetch=0,
            grid=grid,
            in_specs=[
                # x tile: full-extent 784 last dim (== array dim), pipelined over batch.
                pl.BlockSpec((tb, IN_F), lambda i: (i, 0)),
                const(prepared["w1"]), const(prepared["b1"]),
                const(prepared["w2"]), const(prepared["b2"]),
                const(prepared["w3"]), const(prepared["b3"]),
                const(prepared["w4"]), const(prepared["b4"]),
            ],
            out_specs=pl.BlockSpec((tb, N_PAD), lambda i: (i, 0)),
        ),
        compiler_params=pltpu.CompilerParams(
            dimension_semantics=("parallel",),      # megacore sharding on v7x
            vmem_limit_bytes=32 * 1024 * 1024),     # fits TB<=1024 on v5e/v6e/v7x
    )(x, prepared["w1"], prepared["b1"], prepared["w2"], prepared["b2"],
      prepared["w3"], prepared["b3"], prepared["w4"], prepared["b4"])

    return out[:, :OUT_F]


def init_params(key):
    """Deterministic init mirroring the PyTorch module:
    kaiming_normal_ on weights (std = sqrt(2 / fan_in)), nn.Linear default bias init."""
    dims = [(IN_F, H1), (H1, H2), (H2, H3), (H3, OUT_F)]
    params = {}
    for i, (fan_in, fan_out) in enumerate(dims, start=1):
        key, kw, kb = jax.random.split(key, 3)
        std = (2.0 / fan_in) ** 0.5
        params[f"w{i}"] = jax.random.normal(kw, (fan_in, fan_out), jnp.float32) * std
        bound = 1.0 / (fan_in ** 0.5)
        params[f"b{i}"] = jax.random.uniform(
            kb, (1, fan_out), jnp.float32, minval=-bound, maxval=bound)
    return params


def reference_forward_bf16(x, params):
    """Reference mirroring the kernel's bf16-operand / f32-accumulate numerics.
    (bf16 weights/activations are an intentional deviation from the f32 PyTorch module.)"""
    bf = lambda a: a.astype(jnp.bfloat16)
    h = jnp.dot(bf(x), bf(params["w1"]), preferred_element_type=jnp.float32)
    h = jnp.maximum(h + params["b1"], 0.0)
    h = jnp.dot(bf(h), bf(params["w2"]), preferred_element_type=jnp.float32)
    h = jnp.maximum(h + params["b2"], 0.0)
    h = jnp.dot(bf(h), bf(params["w3"]), preferred_element_type=jnp.float32)
    h = jnp.maximum(h + params["b3"], 0.0)
    return jnp.dot(bf(h), bf(params["w4"]), preferred_element_type=jnp.float32) + params["b4"]


if __name__ == "__main__":
    key = jax.random.PRNGKey(0)
    key, kx = jax.random.split(key)
    batch = 8
    x = jax.random.normal(kx, (batch, IN_F), jnp.float32)
    params = init_params(key)

    prepared = prepare_params(params)          # one-time weight prep, hoisted out of forward
    fwd = jax.jit(simple_nn_forward)

    out = jax.block_until_ready(fwd(x, prepared))

    ref = reference_forward_bf16(x, params)
    assert out.shape == (batch, OUT_F)
    assert jnp.allclose(out, ref, atol=1e-2, rtol=1e-2), (
        float(jnp.max(jnp.abs(out - ref))))
    print("KERNEL_OK")
</pallas_src>

<mosaic_0001>
module attributes {stable_mosaic.version = 11 : i64} {
  func.func @mlp_kernel(%arg0: i32, %arg1: memref<8x784xf32, #tpu.memory_space<vmem>>, %arg2: memref<784x512xbf16, #tpu.memory_space<vmem>>, %arg3: memref<1x512xf32, #tpu.memory_space<vmem>>, %arg4: memref<512x256xbf16, #tpu.memory_space<vmem>>, %arg5: memref<1x256xf32, #tpu.memory_space<vmem>>, %arg6: memref<256x128xbf16, #tpu.memory_space<vmem>>, %arg7: memref<1x128xf32, #tpu.memory_space<vmem>>, %arg8: memref<128x128xbf16, #tpu.memory_space<vmem>>, %arg9: memref<1x128xf32, #tpu.memory_space<vmem>>, %arg10: memref<8x128xf32, #tpu.memory_space<vmem>>) attributes {dimension_semantics = [#tpu.dimension_semantics<parallel>], iteration_bounds = array<i64: 1>, scalar_prefetch = 0 : i64, scratch_operands = 0 : i64, tpu.core_type = #tpu.core_type<tc>, window_params = [{transform_indices = @transform_0, window_bounds = array<i64: 8, 784>}, {pipeline_mode = #tpu.pipeline_mode<synchronous>, transform_indices = @transform_1, window_bounds = array<i64: 784, 512>}, {pipeline_mode = #tpu.pipeline_mode<synchronous>, transform_indices = @transform_2, window_bounds = array<i64: 1, 512>}, {pipeline_mode = #tpu.pipeline_mode<synchronous>, transform_indices = @transform_3, window_bounds = array<i64: 512, 256>}, {pipeline_mode = #tpu.pipeline_mode<synchronous>, transform_indices = @transform_4, window_bounds = array<i64: 1, 256>}, {pipeline_mode = #tpu.pipeline_mode<synchronous>, transform_indices = @transform_5, window_bounds = array<i64: 256, 128>}, {pipeline_mode = #tpu.pipeline_mode<synchronous>, transform_indices = @transform_6, window_bounds = array<i64: 1, 128>}, {pipeline_mode = #tpu.pipeline_mode<synchronous>, transform_indices = @transform_7, window_bounds = array<i64: 128, 128>}, {pipeline_mode = #tpu.pipeline_mode<synchronous>, transform_indices = @transform_8, window_bounds = array<i64: 1, 128>}, {transform_indices = @transform_9, window_bounds = array<i64: 8, 128>}]} {
    %c0 = arith.constant 0 : index
    %c0_0 = arith.constant 0 : index
    %0 = vector.load %arg1[%c0, %c0_0] : memref<8x784xf32, #tpu.memory_space<vmem>>, vector<8x784xf32>
    %1 = arith.truncf %0 : vector<8x784xf32> to vector<8x784xbf16>
    %c0_1 = arith.constant 0 : index
    %c0_2 = arith.constant 0 : index
    %2 = vector.load %arg2[%c0_1, %c0_2] : memref<784x512xbf16, #tpu.memory_space<vmem>>, vector<784x512xbf16>
    %cst = arith.constant dense<0.000000e+00> : vector<8x512xf32>
    %3 = tpu.matmul %1, %2, %cst {dimension_numbers = #tpu.dot_dimension_numbers<[1], [0], [0], [1], [0, 0, 1, 1], [], []>} : vector<8x784xbf16>, vector<784x512xbf16>, vector<8x512xf32> -> vector<8x512xf32>
    %c0_3 = arith.constant 0 : index
    %c0_4 = arith.constant 0 : index
    %4 = vector.load %arg3[%c0_3, %c0_4] : memref<1x512xf32, #tpu.memory_space<vmem>>, vector<1x512xf32>
    %5 = vector.broadcast %4 : vector<1x512xf32> to vector<8x512xf32>
    %6 = arith.addf %3, %5 : vector<8x512xf32>
    %cst_5 = arith.constant 0.000000e+00 : f32
    %7 = vector.broadcast %cst_5 : f32 to vector<8x512xf32>
    %8 = arith.maximumf %6, %7 : vector<8x512xf32>
    %9 = arith.truncf %8 : vector<8x512xf32> to vector<8x512xbf16>
    %c0_6 = arith.constant 0 : index
    %c0_7 = arith.constant 0 : index
    %10 = vector.load %arg4[%c0_6, %c0_7] : memref<512x256xbf16, #tpu.memory_space<vmem>>, vector<512x256xbf16>
    %cst_8 = arith.constant dense<0.000000e+00> : vector<8x256xf32>
    %11 = tpu.matmul %9, %10, %cst_8 {dimension_numbers = #tpu.dot_dimension_numbers<[1], [0], [0], [1], [0, 0, 1, 1], [], []>} : vector<8x512xbf16>, vector<512x256xbf16>, vector<8x256xf32> -> vector<8x256xf32>
    %c0_9 = arith.constant 0 : index
    %c0_10 = arith.constant 0 : index
    %12 = vector.load %arg5[%c0_9, %c0_10] : memref<1x256xf32, #tpu.memory_space<vmem>>, vector<1x256xf32>
    %13 = vector.broadcast %12 : vector<1x256xf32> to vector<8x256xf32>
    %14 = arith.addf %11, %13 : vector<8x256xf32>
    %cst_11 = arith.constant 0.000000e+00 : f32
    %15 = vector.broadcast %cst_11 : f32 to vector<8x256xf32>
    %16 = arith.maximumf %14, %15 : vector<8x256xf32>
    %17 = arith.truncf %16 : vector<8x256xf32> to vector<8x256xbf16>
    %c0_12 = arith.constant 0 : index
    %c0_13 = arith.constant 0 : index
    %18 = vector.load %arg6[%c0_12, %c0_13] : memref<256x128xbf16, #tpu.memory_space<vmem>>, vector<256x128xbf16>
    %cst_14 = arith.constant dense<0.000000e+00> : vector<8x128xf32>
    %19 = tpu.matmul %17, %18, %cst_14 {dimension_numbers = #tpu.dot_dimension_numbers<[1], [0], [0], [1], [0, 0, 1, 1], [], []>} : vector<8x256xbf16>, vector<256x128xbf16>, vector<8x128xf32> -> vector<8x128xf32>
    %c0_15 = arith.constant 0 : index
    %c0_16 = arith.constant 0 : index
    %20 = vector.load %arg7[%c0_15, %c0_16] : memref<1x128xf32, #tpu.memory_space<vmem>>, vector<1x128xf32>
    %21 = vector.broadcast %20 : vector<1x128xf32> to vector<8x128xf32>
    %22 = arith.addf %19, %21 : vector<8x128xf32>
    %cst_17 = arith.constant 0.000000e+00 : f32
    %23 = vector.broadcast %cst_17 : f32 to vector<8x128xf32>
    %24 = arith.maximumf %22, %23 : vector<8x128xf32>
    %25 = arith.truncf %24 : vector<8x128xf32> to vector<8x128xbf16>
    %c0_18 = arith.constant 0 : index
    %c0_19 = arith.constant 0 : index
    %26 = vector.load %arg8[%c0_18, %c0_19] : memref<128x128xbf16, #tpu.memory_space<vmem>>, vector<128x128xbf16>
    %cst_20 = arith.constant dense<0.000000e+00> : vector<8x128xf32>
    %27 = tpu.matmul %25, %26, %cst_20 {dimension_numbers = #tpu.dot_dimension_numbers<[1], [0], [0], [1], [0, 0, 1, 1], [], []>} : vector<8x128xbf16>, vector<128x128xbf16>, vector<8x128xf32> -> vector<8x128xf32>
    %c0_21 = arith.constant 0 : index
    %c0_22 = arith.constant 0 : index
    %28 = vector.load %arg9[%c0_21, %c0_22] : memref<1x128xf32, #tpu.memory_space<vmem>>, vector<1x128xf32>
    %29 = vector.broadcast %28 : vector<1x128xf32> to vector<8x128xf32>
    %30 = arith.addf %27, %29 : vector<8x128xf32>
    %c0_23 = arith.constant 0 : index
    %c0_24 = arith.constant 0 : index
    %31 = vector.load %arg10[%c0_23, %c0_24] : memref<8x128xf32, #tpu.memory_space<vmem>>, vector<8x128xf32>
    tpu.vector_store %arg10[%c0_23, %c0_24], %30 {strides = array<i32>} : memref<8x128xf32, #tpu.memory_space<vmem>>, vector<8x128xf32>,
    return
  }
  func.func @transform_0(%arg0: i32) -> (i32, i32) {
    %c0_i32 = arith.constant 0 : i32
    %c0_i32_0 = arith.constant 0 : i32
    return %arg0, %c0_i32 : i32, i32
  }
  func.func @transform_1(%arg0: i32) -> (i32, i32) {
    %c0_i32 = arith.constant 0 : i32
    %c0_i32_0 = arith.constant 0 : i32
    %c0_i32_1 = arith.constant 0 : i32
    return %c0_i32, %c0_i32_0 : i32, i32
  }
  func.func @transform_2(%arg0: i32) -> (i32, i32) {
    %c0_i32 = arith.constant 0 : i32
    %c0_i32_0 = arith.constant 0 : i32
    %c0_i32_1 = arith.constant 0 : i32
    return %c0_i32, %c0_i32_0 : i32, i32
  }
  func.func @transform_3(%arg0: i32) -> (i32, i32) {
    %c0_i32 = arith.constant 0 : i32
    %c0_i32_0 = arith.constant 0 : i32
    %c0_i32_1 = arith.constant 0 : i32
    return %c0_i32, %c0_i32_0 : i32, i32
  }
  func.func @transform_4(%arg0: i32) -> (i32, i32) {
    %c0_i32 = arith.constant 0 : i32
    %c0_i32_0 = arith.constant 0 : i32
    %c0_i32_1 = arith.constant 0 : i32
    return %c0_i32, %c0_i32_0 : i32, i32
  }
  func.func @transform_5(%arg0: i32) -> (i32, i32) {
    %c0_i32 = arith.constant 0 : i32
    %c0_i32_0 = arith.constant 0 : i32
    %c0_i32_1 = arith.constant 0 : i32
    return %c0_i32, %c0_i32_0 : i32, i32
  }
  func.func @transform_6(%arg0: i32) -> (i32, i32) {
    %c0_i32 = arith.constant 0 : i32
    %c0_i32_0 = arith.constant 0 : i32
    %c0_i32_1 = arith.constant 0 : i32
    return %c0_i32, %c0_i32_0 : i32, i32
  }
  func.func @transform_7(%arg0: i32) -> (i32, i32) {
    %c0_i32 = arith.constant 0 : i32
    %c0_i32_0 = arith.constant 0 : i32
    %c0_i32_1 = arith.constant 0 : i32
    return %c0_i32, %c0_i32_0 : i32, i32
  }
  func.func @transform_8(%arg0: i32) -> (i32, i32) {
    %c0_i32 = arith.constant 0 : i32
    %c0_i32_0 = arith.constant 0 : i32
    %c0_i32_1 = arith.constant 0 : i32
    return %c0_i32, %c0_i32_0 : i32, i32
  }
  func.func @transform_9(%arg0: i32) -> (i32, i32) {
    %c0_i32 = arith.constant 0 : i32
    %c0_i32_0 = arith.constant 0 : i32
    return %arg0, %c0_i32 : i32, i32
  }
}

</mosaic_0001>

<llo_original>
// kernel: simple_nn_forward.1
$region0: #{simple_nn_forward.1}
  #allocation0 [shape = 'u32[]', space=smem, size = 0x4, offset = 0x4, fixed_abs, tag = 'smem constant byte address 0x4 - core index']
  #allocation1 [shape = 'u32[72,128]{1,0:T(1,128)}', space=vmem, size = 0x9000, scoped, tag = 'internal scratch']
  %s0 = inlined_call_operand.hbm [shape: f32[8,784], index: 0, kind: input, shape index: {}]
  %s1 = inlined_call_operand.hbm [shape: bf16[784,512], index: 1, kind: input, shape index: {}]
  %s2 = inlined_call_operand.hbm [shape: f32[1,512], index: 2, kind: input, shape index: {}]
  %s3 = inlined_call_operand.hbm [shape: bf16[512,256], index: 3, kind: input, shape index: {}]
  %s4 = inlined_call_operand.hbm [shape: f32[1,256], index: 4, kind: input, shape index: {}]
  %s5 = inlined_call_operand.hbm [shape: bf16[256,128], index: 5, kind: input, shape index: {}]
  %s6 = inlined_call_operand.vmem [shape: f32[1,128], index: 6, kind: input, shape index: {}]
  %s7 = inlined_call_operand.hbm [shape: bf16[128,128], index: 7, kind: input, shape index: {}]
  %s8 = inlined_call_operand.vmem [shape: f32[1,128], index: 8, kind: input, shape index: {}]
  %s9 = inlined_call_operand.hbm [shape: f32[8,128], index: 9, kind: output, shape index: {}]
  %s10 = sld [smem:[#allocation0]]
  $region74: #{simple_nn_forward.1} parent=0
    _
  %s12 = ssub.s32 1, %s10
  %s13 = scalar_select 0, %s12, %s10
  $region1: #{simple_nn_forward.1} parent=0
    #allocation2 [shape = 'u8[28672]{0}', space=vmem, size = 0x7000, scoped, tag = 'input window, operand 0, single buffered']
    #allocation3 [shape = 's32[1]{0}', space=sflag, size = 0x4, scoped, tag = 'scoped memory for simple_nn_forward.1']
    #allocation4 [shape = 's32[1]{0}', space=sflag, size = 0x4, scoped, tag = 'scoped memory for simple_nn_forward.1']
    #allocation5 [shape = 'u8[802816]{0}', space=vmem, size = 0xc4000, scoped, tag = 'input window, operand 1, single buffered']
    #allocation6 [shape = 's32[1]{0}', space=sflag, size = 0x4, scoped, tag = 'scoped memory for simple_nn_forward.1']
    #allocation7 [shape = 'u8[2048]{0}', space=vmem, size = 0x800, scoped, tag = 'input window, operand 2, single buffered']
    #allocation8 [shape = 'u8[262144]{0}', space=vmem, size = 0x40000, scoped, tag = 'input window, operand 3, single buffered']
    #allocation9 [shape = 's32[1]{0}', space=sflag, size = 0x4, scoped, tag = 'scoped memory for simple_nn_forward.1']
    #allocation10 [shape = 'u8[1024]{0}', space=vmem, size = 0x400, scoped, tag = 'input window, operand 4, single buffered']
    #allocation11 [shape = 'u8[65536]{0}', space=vmem, size = 0x10000, scoped, tag = 'input window, operand 5, single buffered']
    #allocation12 [shape = 's32[1]{0}', space=sflag, size = 0x4, scoped, tag = 'scoped memory for simple_nn_forward.1']
    #allocation13 [shape = 'u8[32768]{0}', space=vmem, size = 0x8000, scoped, tag = 'input window, operand 7, single buffered']
    #allocation14 [shape = 'u8[4096]{0}', space=vmem, size = 0x1000, scoped, tag = 'output window, operand 0, single buffered']
    %14 = vsyncpa [#allocation3], 0
    %15 = vsyncpa [#allocation6], 0
    %16 = vsyncpa [#allocation9], 0
    %17 = vsyncpa [#allocation12], 0
    %18 = vsyncpa [#allocation4], 0
    // Predicated region
    $region2: #{simple_nn_forward.1} parent=1 // pred_check
      _
    $region3: #{simple_nn_forward.1} parent=1 // pred_check_branch
      %20 = sbr.rel (0) target = $region5
    $region4: #{simple_nn_forward.1} parent=1 // pred_region
      %22 = vsyncadd [#allocation3], 0
      %s24 = sshll.u32 %s0, 4
      %s25 = int_to_ptr.hbm [resolvable:$true] %s24
      %s26 = sshll.u32 [#allocation2], 4
      %s27 = int_to_ptr.vmem [resolvable:$true] %s26
      %29 = dma.hbm_to_vmem [thread:$0]  %s25, 896, %s27, [#allocation3]
    $region5: #{simple_nn_forward.1} parent=1 // pred_fallthru
      _
    // Predicated region
    $region6: #{simple_nn_forward.1} parent=1 // pred_check
      _
    $region7: #{simple_nn_forward.1} parent=1 // pred_check_branch
      %31 = sbr.rel (0) target = $region9
    $region8: #{simple_nn_forward.1} parent=1 // pred_region
      %33 = vsyncadd [#allocation6], 0
      %s34 = sshll.u32 %s1, 4
      %s35 = int_to_ptr.hbm [resolvable:$true] %s34
      %s36 = sshll.u32 [#allocation5], 4
      %s37 = int_to_ptr.vmem [resolvable:$true] %s36
      %42 = dma.hbm_to_vmem [thread:$0]  %s35, 25088, %s37, [#allocation6], 256, 256, 16
    $region9: #{simple_nn_forward.1} parent=1 // pred_fallthru
      _
    // Predicated region
    $region10: #{simple_nn_forward.1} parent=1 // pred_check
      _
    $region11: #{simple_nn_forward.1} parent=1 // pred_check_branch
      %44 = sbr.rel (0) target = $region13
    $region12: #{simple_nn_forward.1} parent=1 // pred_region
      %46 = vsyncadd [#allocation6], 0
      %s48 = sshll.u32 %s2, 4
      %s49 = int_to_ptr.hbm [resolvable:$true] %s48
      %s50 = sshll.u32 [#allocation7], 4
      %s51 = int_to_ptr.vmem [resolvable:$true] %s50
      %53 = dma.hbm_to_vmem [thread:$0]  %s49, 64, %s51, [#allocation6]
    $region13: #{simple_nn_forward.1} parent=1 // pred_fallthru
      _
    // Predicated region
    $region14: #{simple_nn_forward.1} parent=1 // pred_check
      _
    $region15: #{simple_nn_forward.1} parent=1 // pred_check_branch
      %55 = sbr.rel (0) target = $region17
    $region16: #{simple_nn_forward.1} parent=1 // pred_region
      %57 = vsyncadd [#allocation9], 0
      %s58 = sshll.u32 %s3, 4
      %s59 = int_to_ptr.hbm [resolvable:$true] %s58
      %s60 = sshll.u32 [#allocation8], 4
      %s61 = int_to_ptr.vmem [resolvable:$true] %s60
      %66 = dma.hbm_to_vmem [thread:$0]  %s59, 8192, %s61, [#allocation9], 128, 128, 8
    $region17: #{simple_nn_forward.1} parent=1 // pred_fallthru
      _
    // Predicated region
    $region18: #{simple_nn_forward.1} parent=1 // pred_check
      _
    $region19: #{simple_nn_forward.1} parent=1 // pred_check_branch
      %68 = sbr.rel (0) target = $region21
    $region20: #{simple_nn_forward.1} parent=1 // pred_region
      %70 = vsyncadd [#allocation9], 0
      %s72 = sshll.u32 %s4, 4
      %s73 = int_to_ptr.hbm [resolvable:$true] %s72
      %s74 = sshll.u32 [#allocation10], 4
      %s75 = int_to_ptr.vmem [resolvable:$true] %s74
      %77 = dma.hbm_to_vmem [thread:$0]  %s73, 32, %s75, [#allocation9]
    $region21: #{simple_nn_forward.1} parent=1 // pred_fallthru
      _
    // Predicated region
    $region22: #{simple_nn_forward.1} parent=1 // pred_check
      _
    $region23: #{simple_nn_forward.1} parent=1 // pred_check_branch
      %79 = sbr.rel (0) target = $region25
    $region24: #{simple_nn_forward.1} parent=1 // pred_region
      %81 = vsyncadd [#allocation12], 0
      %s82 = sshll.u32 %s5, 4
      %s83 = int_to_ptr.hbm [resolvable:$true] %s82
      %s84 = sshll.u32 [#allocation11], 4
      %s85 = int_to_ptr.vmem [resolvable:$true] %s84
      %90 = dma.hbm_to_vmem [thread:$0]  %s83, 2048, %s85, [#allocation12], 64, 64, 4
    $region25: #{simple_nn_forward.1} parent=1 // pred_fallthru
      _
    // Predicated region
    $region26: #{simple_nn_forward.1} parent=1 // pred_check
      _
    $region27: #{simple_nn_forward.1} parent=1 // pred_check_branch
      %92 = sbr.rel (0) target = $region29
    $region28: #{simple_nn_forward.1} parent=1 // pred_region
      _
    $region29: #{simple_nn_forward.1} parent=1 // pred_fallthru
      _
    // Predicated region
    $region30: #{simple_nn_forward.1} parent=1 // pred_check
      _
    $region31: #{simple_nn_forward.1} parent=1 // pred_check_branch
      %94 = sbr.rel (0) target = $region33
    $region32: #{simple_nn_forward.1} parent=1 // pred_region
      %96 = vsyncadd [#allocation12], 0
      %s97 = sshll.u32 %s7, 4
      %s98 = int_to_ptr.hbm [resolvable:$true] %s97
      %s99 = sshll.u32 [#allocation13], 4
      %s100 = int_to_ptr.vmem [resolvable:$true] %s99
      %105 = dma.hbm_to_vmem [thread:$0]  %s98, 1024, %s100, [#allocation12], 64, 64, 4
    $region33: #{simple_nn_forward.1} parent=1 // pred_fallthru
      _
    // Predicated region
    $region34: #{simple_nn_forward.1} parent=1 // pred_check
      _
    $region35: #{simple_nn_forward.1} parent=1 // pred_check_branch
      %107 = sbr.rel (0) target = $region37
    $region36: #{simple_nn_forward.1} parent=1 // pred_region
      _
    $region37: #{simple_nn_forward.1} parent=1 // pred_fallthru
      _
    // Predicated region
    $region38: #{simple_nn_forward.1} parent=1 // pred_check
      _
    $region39: #{simple_nn_forward.1} parent=1 // pred_check_branch
      %109 = sbr.rel (0) target = $region41
    $region40: #{simple_nn_forward.1} parent=1 // pred_region
      %111 = dma.done [#allocation3], 896
    $region41: #{simple_nn_forward.1} parent=1 // pred_fallthru
      _
    // Predicated region
    $region42: #{simple_nn_forward.1} parent=1 // pred_check
      _
    $region43: #{simple_nn_forward.1} parent=1 // pred_check_branch
      %113 = sbr.rel (0) target = $region45
    $region44: #{simple_nn_forward.1} parent=1 // pred_region
      %115 = dma.done [#allocation6], 25088
    $region45: #{simple_nn_forward.1} parent=1 // pred_fallthru
      _
    // Predicated region
    $region46: #{simple_nn_forward.1} parent=1 // pred_check
      _
    $region47: #{simple_nn_forward.1} parent=1 // pred_check_branch
      %117 = sbr.rel (0) target = $region49
    $region48: #{simple_nn_forward.1} parent=1 // pred_region
      %119 = dma.done [#allocation6], 64
    $region49: #{simple_nn_forward.1} parent=1 // pred_fallthru
      _
    // Predicated region
    $region50: #{simple_nn_forward.1} parent=1 // pred_check
      _
    $region51: #{simple_nn_forward.1} parent=1 // pred_check_branch
      %121 = sbr.rel (0) target = $region53
    $region52: #{simple_nn_forward.1} parent=1 // pred_region
      %123 = dma.done [#allocation9], 8192
    $region53: #{simple_nn_forward.1} parent=1 // pred_fallthru
      _
    // Predicated region
    $region54: #{simple_nn_forward.1} parent=1 // pred_check
      _
    $region55: #{simple_nn_forward.1} parent=1 // pred_check_branch
      %125 = sbr.rel (0) target = $region57
    $region56: #{simple_nn_forward.1} parent=1 // pred_region
      %127 = dma.done [#allocation9], 32
    $region57: #{simple_nn_forward.1} parent=1 // pred_fallthru
      _
    // Predicated region
    $region58: #{simple_nn_forward.1} parent=1 // pred_check
      _
    $region59: #{simple_nn_forward.1} parent=1 // pred_check_branch
      %129 = sbr.rel (0) target = $region61
    $region60: #{simple_nn_forward.1} parent=1 // pred_region
      %131 = dma.done [#allocation12], 2048
    $region61: #{simple_nn_forward.1} parent=1 // pred_fallthru
      _
    // Predicated region
    $region62: #{simple_nn_forward.1} parent=1 // pred_check
      _
    $region63: #{simple_nn_forward.1} parent=1 // pred_check_branch
      %133 = sbr.rel (0) target = $region65
    $region64: #{simple_nn_forward.1} parent=1 // pred_region
      %135 = dma.done [#allocation12], 1024
    $region65: #{simple_nn_forward.1} parent=1 // pred_fallthru
      _
    %v137 = vld [vmem:[#allocation2] sm:$0xff]
    %v138 = vld [vmem:[#allocation2 + $0x8] sm:$0xff]
    %v139 = vld [vmem:[#allocation2 + $0x10] sm:$0xff]
    %v140 = vld [vmem:[#allocation2 + $0x18] sm:$0xff]
    %v141 = vld [vmem:[#allocation2 + $0x20] sm:$0xff]
    %v142 = vld [vmem:[#allocation2 + $0x28] sm:$0xff]
    %v143 = vld [vmem:[#allocation2 + $0x30] sm:$0xff]
    %v144 = vpack.c.bf16 %v137, %v137
    %v145 = vpack.c.bf16 %v138, %v138
    %v146 = vpack.c.bf16 %v139, %v139
    %v147 = vpack.c.bf16 %v140, %v140
    %v148 = vpack.c.bf16 %v141, %v141
    %v149 = vpack.c.bf16 %v142, %v142
    %v150 = vpack.c.bf16 %v143, %v143
    %v151 = vld [vmem:[#allocation5] sm:$0xff]
    %v152 = vld [vmem:[#allocation5 + $0x8] sm:$0xff]
    %v153 = vld [vmem:[#allocation5 + $0x10] sm:$0xff]
    %v154 = vld [vmem:[#allocation5 + $0x18] sm:$0xff]
    %v155 = vld [vmem:[#allocation5 + $0x20] sm:$0xff]
    %v156 = vld [vmem:[#allocation5 + $0x28] sm:$0xff]
    %v157 = vld [vmem:[#allocation5 + $0x30] sm:$0xff]
    %v158 = vld [vmem:[#allocation5 + $0x38] sm:$0xff]
    %v159 = vld [vmem:[#allocation5 + $0x40] sm:$0xff]
    %v160 = vld [vmem:[#allocation5 + $0x48] sm:$0xff]
    %v161 = vld [vmem:[#allocation5 + $0x50] sm:$0xff]
    %v162 = vld [vmem:[#allocation5 + $0x58] sm:$0xff]
    %v163 = vld [vmem:[#allocation5 + $0x60] sm:$0xff]
    %v164 = vld [vmem:[#allocation5 + $0x68] sm:$0xff]
    %v165 = vld [vmem:[#allocation5 + $0x70] sm:$0xff]
    %v166 = vld [vmem:[#allocation5 + $0x78] sm:$0xff]
    %v167 = vld [vmem:[#allocation5 + $0x80] sm:$0xff]
    %v168 = vld [vmem:[#allocation5 + $0x88] sm:$0xff]
    %v169 = vld [vmem:[#allocation5 + $0x90] sm:$0xff]
    %v170 = vld [vmem:[#allocation5 + $0x98] sm:$0xff]
    %v171 = vld [vmem:[#allocation5 + $0xa0] sm:$0xff]
    %v172 = vld [vmem:[#allocation5 + $0xa8] sm:$0xff]
    %v173 = vld [vmem:[#allocation5 + $0xb0] sm:$0xff]
    %v174 = vld [vmem:[#allocation5 + $0xb8] sm:$0xff]
    %v175 = vld [vmem:[#allocation5 + $0xc0] sm:$0xff]
    %v176 = vld [vmem:[#allocation5 + $0xc8] sm:$0xff]
    %v177 = vld [vmem:[#allocation5 + $0xd0] sm:$0xff]
    %v178 = vld [vmem:[#allocation5 + $0xd8] sm:$0xff]
    %v179 = vld [vmem:[#allocation5 + $0xe0] sm:$0xff]
    %v180 = vld [vmem:[#allocation5 + $0xe8] sm:$0xff]
    %v181 = vld [vmem:[#allocation5 + $0xf0] sm:$0xff]
    %v182 = vld [vmem:[#allocation5 + $0xf8] sm:$0xff]
    %v183 = vld [vmem:[#allocation5 + $0x100] sm:$0xff]
    %v184 = vld [vmem:[#allocation5 + $0x108] sm:$0xff]
    %v185 = vld [vmem:[#allocation5 + $0x110] sm:$0xff]
    %v186 = vld [vmem:[#allocation5 + $0x118] sm:$0xff]
    %v187 = vld [vmem:[#allocation5 + $0x120] sm:$0xff]
    %v188 = vld [vmem:[#allocation5 + $0x128] sm:$0xff]
    %v189 = vld [vmem:[#allocation5 + $0x130] sm:$0xff]
    %v190 = vld [vmem:[#allocation5 + $0x138] sm:$0xff]
    %v191 = vld [vmem:[#allocation5 + $0x140] sm:$0xff]
    %v192 = vld [vmem:[#allocation5 + $0x148] sm:$0xff]
    %v193 = vld [vmem:[#allocation5 + $0x150] sm:$0xff]
    %v194 = vld [vmem:[#allocation5 + $0x158] sm:$0xff]
    %v195 = vld [vmem:[#allocation5 + $0x160] sm:$0xff]
    %v196 = vld [vmem:[#allocation5 + $0x168] sm:$0xff]
    %v197 = vld [vmem:[#allocation5 + $0x170] sm:$0xff]
    %v198 = vld [vmem:[#allocation5 + $0x178] sm:$0xff]
    %v199 = vld [vmem:[#allocation5 + $0x180] sm:$0xff]
    %v200 = vld [vmem:[#allocation5 + $0x188] sm:$0xff]
    %v201 = vld [vmem:[#allocation5 + $0x190] sm:$0xff]
    %v202 = vld [vmem:[#allocation5 + $0x198] sm:$0xff]
    %v203 = vld [vmem:[#allocation5 + $0x1a0] sm:$0xff]
    %v204 = vld [vmem:[#allocation5 + $0x1a8] sm:$0xff]
    %v205 = vld [vmem:[#allocation5 + $0x1b0] sm:$0xff]
    %v206 = vld [vmem:[#allocation5 + $0x1b8] sm:$0xff]
    %v207 = vld [vmem:[#allocation5 + $0x1c0] sm:$0xff]
    %v208 = vld [vmem:[#allocation5 + $0x1c8] sm:$0xff]
    %v209 = vld [vmem:[#allocation5 + $0x1d0] sm:$0xff]
    %v210 = vld [vmem:[#allocation5 + $0x1d8] sm:$0xff]
    %v211 = vld [vmem:[#allocation5 + $0x1e0] sm:$0xff]
    %v212 = vld [vmem:[#allocation5 + $0x1e8] sm:$0xff]
    %v213 = vld [vmem:[#allocation5 + $0x1f0] sm:$0xff]
    %v214 = vld [vmem:[#allocation5 + $0x1f8] sm:$0xff]
    %v215 = vld [vmem:[#allocation5 + $0x200] sm:$0xff]
    %v216 = vld [vmem:[#allocation5 + $0x208] sm:$0xff]
    %v217 = vld [vmem:[#allocation5 + $0x210] sm:$0xff]
    %v218 = vld [vmem:[#allocation5 + $0x218] sm:$0xff]
    %v219 = vld [vmem:[#allocation5 + $0x220] sm:$0xff]
    %v220 = vld [vmem:[#allocation5 + $0x228] sm:$0xff]
    %v221 = vld [vmem:[#allocation5 + $0x230] sm:$0xff]
    %v222 = vld [vmem:[#allocation5 + $0x238] sm:$0xff]
    %v223 = vld [vmem:[#allocation5 + $0x240] sm:$0xff]
    %v224 = vld [vmem:[#allocation5 + $0x248] sm:$0xff]
    %v225 = vld [vmem:[#allocation5 + $0x250] sm:$0xff]
    %v226 = vld [vmem:[#allocation5 + $0x258] sm:$0xff]
    %v227 = vld [vmem:[#allocation5 + $0x260] sm:$0xff]
    %v228 = vld [vmem:[#allocation5 + $0x268] sm:$0xff]
    %v229 = vld [vmem:[#allocation5 + $0x270] sm:$0xff]
    %v230 = vld [vmem:[#allocation5 + $0x278] sm:$0xff]
    %v231 = vld [vmem:[#allocation5 + $0x280] sm:$0xff]
    %v232 = vld [vmem:[#allocation5 + $0x288] sm:$0xff]
    %v233 = vld [vmem:[#allocation5 + $0x290] sm:$0xff]
    %v234 = vld [vmem:[#allocation5 + $0x298] sm:$0xff]
    %v235 = vld [vmem:[#allocation5 + $0x2a0] sm:$0xff]
    %v236 = vld [vmem:[#allocation5 + $0x2a8] sm:$0xff]
    %v237 = vld [vmem:[#allocation5 + $0x2b0] sm:$0xff]
    %v238 = vld [vmem:[#allocation5 + $0x2b8] sm:$0xff]
    %v239 = vld [vmem:[#allocation5 + $0x2c0] sm:$0xff]
    %v240 = vld [vmem:[#allocation5 + $0x2c8] sm:$0xff]
    %v241 = vld [vmem:[#allocation5 + $0x2d0] sm:$0xff]
    %v242 = vld [vmem:[#allocation5 + $0x2d8] sm:$0xff]
    %v243 = vld [vmem:[#allocation5 + $0x2e0] sm:$0xff]
    %v244 = vld [vmem:[#allocation5 + $0x2e8] sm:$0xff]
    %v245 = vld [vmem:[#allocation5 + $0x2f0] sm:$0xff]
    %v246 = vld [vmem:[#allocation5 + $0x2f8] sm:$0xff]
    %v247 = vld [vmem:[#allocation5 + $0x300] sm:$0xff]
    %v248 = vld [vmem:[#allocation5 + $0x308] sm:$0xff]
    %v249 = vld [vmem:[#allocation5 + $0x310] sm:$0xff]
    %v250 = vld [vmem:[#allocation5 + $0x318] sm:$0xff]
    %v251 = vld [vmem:[#allocation5 + $0x320] sm:$0xff]
    %v252 = vld [vmem:[#allocation5 + $0x328] sm:$0xff]
    %v253 = vld [vmem:[#allocation5 + $0x330] sm:$0xff]
    %v254 = vld [vmem:[#allocation5 + $0x338] sm:$0xff]
    %v255 = vld [vmem:[#allocation5 + $0x340] sm:$0xff]
    %v256 = vld [vmem:[#allocation5 + $0x348] sm:$0xff]
    %v257 = vld [vmem:[#allocation5 + $0x350] sm:$0xff]
    %v258 = vld [vmem:[#allocation5 + $0x358] sm:$0xff]
    %v259 = vld [vmem:[#allocation5 + $0x360] sm:$0xff]
    %v260 = vld [vmem:[#allocation5 + $0x368] sm:$0xff]
    %v261 = vld [vmem:[#allocation5 + $0x370] sm:$0xff]
    %v262 = vld [vmem:[#allocation5 + $0x378] sm:$0xff]
    %v263 = vld [vmem:[#allocation5 + $0x380] sm:$0xff]
    %v264 = vld [vmem:[#allocation5 + $0x388] sm:$0xff]
    %v265 = vld [vmem:[#allocation5 + $0x390] sm:$0xff]
    %v266 = vld [vmem:[#allocation5 + $0x398] sm:$0xff]
    %v267 = vld [vmem:[#allocation5 + $0x3a0] sm:$0xff]
    %v268 = vld [vmem:[#allocation5 + $0x3a8] sm:$0xff]
    %v269 = vld [vmem:[#allocation5 + $0x3b0] sm:$0xff]
    %v270 = vld [vmem:[#allocation5 + $0x3b8] sm:$0xff]
    %v271 = vld [vmem:[#allocation5 + $0x3c0] sm:$0xff]
    %v272 = vld [vmem:[#allocation5 + $0x3c8] sm:$0xff]
    %v273 = vld [vmem:[#allocation5 + $0x3d0] sm:$0xff]
    %v274 = vld [vmem:[#allocation5 + $0x3d8] sm:$0xff]
    %v275 = vld [vmem:[#allocation5 + $0x3e0] sm:$0xff]
    %v276 = vld [vmem:[#allocation5 + $0x3e8] sm:$0xff]
    %v277 = vld [vmem:[#allocation5 + $0x3f0] sm:$0xff]
    %v278 = vld [vmem:[#allocation5 + $0x3f8] sm:$0xff]
    %v279 = vld [vmem:[#allocation5 + $0x400] sm:$0xff]
    %v280 = vld [vmem:[#allocation5 + $0x408] sm:$0xff]
    %v281 = vld [vmem:[#allocation5 + $0x410] sm:$0xff]
    %v282 = vld [vmem:[#allocation5 + $0x418] sm:$0xff]
    %v283 = vld [vmem:[#allocation5 + $0x420] sm:$0xff]
    %v284 = vld [vmem:[#allocation5 + $0x428] sm:$0xff]
    %v285 = vld [vmem:[#allocation5 + $0x430] sm:$0xff]
    %v286 = vld [vmem:[#allocation5 + $0x438] sm:$0xff]
    %v287 = vld [vmem:[#allocation5 + $0x440] sm:$0xff]
    %v288 = vld [vmem:[#allocation5 + $0x448] sm:$0xff]
    %v289 = vld [vmem:[#allocation5 + $0x450] sm:$0xff]
    %v290 = vld [vmem:[#allocation5 + $0x458] sm:$0xff]
    %v291 = vld [vmem:[#allocation5 + $0x460] sm:$0xff]
    %v292 = vld [vmem:[#allocation5 + $0x468] sm:$0xff]
    %v293 = vld [vmem:[#allocation5 + $0x470] sm:$0xff]
    %v294 = vld [vmem:[#allocation5 + $0x478] sm:$0xff]
    %v295 = vld [vmem:[#allocation5 + $0x480] sm:$0xff]
    %v296 = vld [vmem:[#allocation5 + $0x488] sm:$0xff]
    %v297 = vld [vmem:[#allocation5 + $0x490] sm:$0xff]
    %v298 = vld [vmem:[#allocation5 + $0x498] sm:$0xff]
    %v299 = vld [vmem:[#allocation5 + $0x4a0] sm:$0xff]
    %v300 = vld [vmem:[#allocation5 + $0x4a8] sm:$0xff]
    %v301 = vld [vmem:[#allocation5 + $0x4b0] sm:$0xff]
    %v302 = vld [vmem:[#allocation5 + $0x4b8] sm:$0xff]
    %v303 = vld [vmem:[#allocation5 + $0x4c0] sm:$0xff]
    %v304 = vld [vmem:[#allocation5 + $0x4c8] sm:$0xff]
    %v305 = vld [vmem:[#allocation5 + $0x4d0] sm:$0xff]
    %v306 = vld [vmem:[#allocation5 + $0x4d8] sm:$0xff]
    %v307 = vld [vmem:[#allocation5 + $0x4e0] sm:$0xff]
    %v308 = vld [vmem:[#allocation5 + $0x4e8] sm:$0xff]
    %v309 = vld [vmem:[#allocation5 + $0x4f0] sm:$0xff]
    %v310 = vld [vmem:[#allocation5 + $0x4f8] sm:$0xff]
    %v311 = vld [vmem:[#allocation5 + $0x500] sm:$0xff]
    %v312 = vld [vmem:[#allocation5 + $0x508] sm:$0xff]
    %v313 = vld [vmem:[#allocation5 + $0x510] sm:$0xff]
    %v314 = vld [vmem:[#allocation5 + $0x518] sm:$0xff]
    %v315 = vld [vmem:[#allocation5 + $0x520] sm:$0xff]
    %v316 = vld [vmem:[#allocation5 + $0x528] sm:$0xff]
    %v317 = vld [vmem:[#allocation5 + $0x530] sm:$0xff]
    %v318 = vld [vmem:[#allocation5 + $0x538] sm:$0xff]
    %v319 = vld [vmem:[#allocation5 + $0x540] sm:$0xff]
    %v320 = vld [vmem:[#allocation5 + $0x548] sm:$0xff]
    %v321 = vld [vmem:[#allocation5 + $0x550] sm:$0xff]
    %v322 = vld [vmem:[#allocation5 + $0x558] sm:$0xff]
    %v323 = vld [vmem:[#allocation5 + $0x560] sm:$0xff]
    %v324 = vld [vmem:[#allocation5 + $0x568] sm:$0xff]
    %v325 = vld [vmem:[#allocation5 + $0x570] sm:$0xff]
    %v326 = vld [vmem:[#allocation5 + $0x578] sm:$0xff]
    %v327 = vld [vmem:[#allocation5 + $0x580] sm:$0xff]
    %v328 = vld [vmem:[#allocation5 + $0x588] sm:$0xff]
    %v329 = vld [vmem:[#allocation5 + $0x590] sm:$0xff]
    %v330 = vld [vmem:[#allocation5 + $0x598] sm:$0xff]
    %v331 = vld [vmem:[#allocation5 + $0x5a0] sm:$0xff]
    %v332 = vld [vmem:[#allocation5 + $0x5a8] sm:$0xff]
    %v333 = vld [vmem:[#allocation5 + $0x5b0] sm:$0xff]
    %v334 = vld [vmem:[#allocation5 + $0x5b8] sm:$0xff]
    %v335 = vld [vmem:[#allocation5 + $0x5c0] sm:$0xff]
    %v336 = vld [vmem:[#allocation5 + $0x5c8] sm:$0xff]
    %v337 = vld [vmem:[#allocation5 + $0x5d0] sm:$0xff]
    %v338 = vld [vmem:[#allocation5 + $0x5d8] sm:$0xff]
    %v339 = vld [vmem:[#allocation5 + $0x5e0] sm:$0xff]
    %v340 = vld [vmem:[#allocation5 + $0x5e8] sm:$0xff]
    %v341 = vld [vmem:[#allocation5 + $0x5f0] sm:$0xff]
    %v342 = vld [vmem:[#allocation5 + $0x5f8] sm:$0xff]
    %v343 = vld [vmem:[#allocation5 + $0x600] sm:$0xff]
    %v344 = vld [vmem:[#allocation5 + $0x608] sm:$0xff]
    %v345 = vld [vmem:[#allocation5 + $0x610] sm:$0xff]
    %v346 = vld [vmem:[#allocation5 + $0x618] sm:$0xff]
    %v347 = vld [vmem:[#allocation7] sm:$0xf]
    %v349 = vperm.slane %v347, 0
    %v350 = vperm.slane %v347, 1
    %v351 = vperm.slane %v347, 2
    %v352 = vperm.slane %v347, 3
    %v553 = vunpack.c.l.b16 %v151
    %v554 = vunpack.c.h.b16 %v151
    %v555 = vunpack.c.l.b16 %v152
    %v556 = vunpack.c.h.b16 %v152
    %v557 = vunpack.c.l.b16 %v153
    %v558 = vunpack.c.h.b16 %v153
    %v559 = vunpack.c.l.b16 %v154
    %v560 = vunpack.c.h.b16 %v154
    %v561 = vunpack.c.l.b16 %v155
    %v562 = vunpack.c.h.b16 %v155
    %v563 = vunpack.c.l.b16 %v156
    %v564 = vunpack.c.h.b16 %v156
    %v565 = vunpack.c.l.b16 %v157
    %v566 = vunpack.c.h.b16 %v157
    %v567 = vunpack.c.l.b16 %v158
    %v568 = vunpack.c.h.b16 %v158
    %v569 = vunpack.c.l.b16 %v159
    %v570 = vunpack.c.h.b16 %v159
    %v571 = vunpack.c.l.b16 %v160
    %v572 = vunpack.c.h.b16 %v160
    %v573 = vunpack.c.l.b16 %v161
    %v574 = vunpack.c.h.b16 %v161
    %v575 = vunpack.c.l.b16 %v162
    %v576 = vunpack.c.h.b16 %v162
    %v577 = vunpack.c.l.b16 %v163
    %v578 = vunpack.c.h.b16 %v163
    %v579 = vunpack.c.l.b16 %v164
    %v580 = vunpack.c.h.b16 %v164
    %v581 = vunpack.c.l.b16 %v165
    %v582 = vunpack.c.h.b16 %v165
    %v583 = vunpack.c.l.b16 %v166
    %v584 = vunpack.c.h.b16 %v166
    %v585 = vunpack.c.l.b16 %v167
    %v586 = vunpack.c.h.b16 %v167
    %v587 = vunpack.c.l.b16 %v168
    %v588 = vunpack.c.h.b16 %v168
    %v589 = vunpack.c.l.b16 %v169
    %v590 = vunpack.c.h.b16 %v169
    %v591 = vunpack.c.l.b16 %v170
    %v592 = vunpack.c.h.b16 %v170
    %v593 = vunpack.c.l.b16 %v171
    %v594 = vunpack.c.h.b16 %v171
    %v595 = vunpack.c.l.b16 %v172
    %v596 = vunpack.c.h.b16 %v172
    %v597 = vunpack.c.l.b16 %v173
    %v598 = vunpack.c.h.b16 %v173
    %v599 = vunpack.c.l.b16 %v174
    %v600 = vunpack.c.h.b16 %v174
    %v601 = vunpack.c.l.b16 %v175
    %v602 = vunpack.c.h.b16 %v175
    %v603 = vunpack.c.l.b16 %v176
    %v604 = vunpack.c.h.b16 %v176
    %v605 = vunpack.c.l.b16 %v177
    %v606 = vunpack.c.h.b16 %v177
    %v607 = vunpack.c.l.b16 %v178
    %v608 = vunpack.c.h.b16 %v178
    %v609 = vunpack.c.l.b16 %v179
    %v610 = vunpack.c.h.b16 %v179
    %v611 = vunpack.c.l.b16 %v180
    %v612 = vunpack.c.h.b16 %v180
    %v613 = vunpack.c.l.b16 %v181
    %v614 = vunpack.c.h.b16 %v181
    %v615 = vunpack.c.l.b16 %v182
    %v616 = vunpack.c.h.b16 %v182
    %v617 = vunpack.c.l.b16 %v183
    %v618 = vunpack.c.h.b16 %v183
    %v619 = vunpack.c.l.b16 %v184
    %v620 = vunpack.c.h.b16 %v184
    %v621 = vunpack.c.l.b16 %v185
    %v622 = vunpack.c.h.b16 %v185
    %v623 = vunpack.c.l.b16 %v186
    %v624 = vunpack.c.h.b16 %v186
    %v625 = vunpack.c.l.b16 %v187
    %v626 = vunpack.c.h.b16 %v187
    %v627 = vunpack.c.l.b16 %v188
    %v628 = vunpack.c.h.b16 %v188
    %v629 = vunpack.c.l.b16 %v189
    %v630 = vunpack.c.h.b16 %v189
    %v631 = vunpack.c.l.b16 %v190
    %v632 = vunpack.c.h.b16 %v190
    %v633 = vunpack.c.l.b16 %v191
    %v634 = vunpack.c.h.b16 %v191
    %v635 = vunpack.c.l.b16 %v192
    %v636 = vunpack.c.h.b16 %v192
    %v637 = vunpack.c.l.b16 %v193
    %v638 = vunpack.c.h.b16 %v193
    %v639 = vunpack.c.l.b16 %v194
    %v640 = vunpack.c.h.b16 %v194
    %v641 = vunpack.c.l.b16 %v195
    %v642 = vunpack.c.h.b16 %v195
    %v643 = vunpack.c.l.b16 %v196
    %v644 = vunpack.c.h.b16 %v196
    %v645 = vunpack.c.l.b16 %v197
    %v646 = vunpack.c.h.b16 %v197
    %v647 = vunpack.c.l.b16 %v198
    %v648 = vunpack.c.h.b16 %v198
    %v649 = vunpack.c.l.b16 %v199
    %v650 = vunpack.c.h.b16 %v199
    %v651 = vunpack.c.l.b16 %v200
    %v652 = vunpack.c.h.b16 %v200
    %v653 = vunpack.c.l.b16 %v201
    %v654 = vunpack.c.h.b16 %v201
    %v655 = vunpack.c.l.b16 %v202
    %v656 = vunpack.c.h.b16 %v202
    %v657 = vunpack.c.l.b16 %v203
    %v658 = vunpack.c.h.b16 %v203
    %v659 = vunpack.c.l.b16 %v204
    %v660 = vunpack.c.h.b16 %v204
    %v661 = vunpack.c.l.b16 %v205
    %v662 = vunpack.c.h.b16 %v205
    %v663 = vunpack.c.l.b16 %v206
    %v664 = vunpack.c.h.b16 %v206
    %v665 = vunpack.c.l.b16 %v207
    %v666 = vunpack.c.h.b16 %v207
    %v667 = vunpack.c.l.b16 %v208
    %v668 = vunpack.c.h.b16 %v208
    %v669 = vunpack.c.l.b16 %v209
    %v670 = vunpack.c.h.b16 %v209
    %v671 = vunpack.c.l.b16 %v210
    %v672 = vunpack.c.h.b16 %v210
    %v673 = vunpack.c.l.b16 %v211
    %v674 = vunpack.c.h.b16 %v211
    %v675 = vunpack.c.l.b16 %v212
    %v676 = vunpack.c.h.b16 %v212
    %v677 = vunpack.c.l.b16 %v213
    %v678 = vunpack.c.h.b16 %v213
    %v679 = vunpack.c.l.b16 %v214
    %v680 = vunpack.c.h.b16 %v214
    %v681 = vunpack.c.l.b16 %v215
    %v682 = vunpack.c.h.b16 %v215
    %v683 = vunpack.c.l.b16 %v216
    %v684 = vunpack.c.h.b16 %v216
    %v685 = vunpack.c.l.b16 %v217
    %v686 = vunpack.c.h.b16 %v217
    %v687 = vunpack.c.l.b16 %v218
    %v688 = vunpack.c.h.b16 %v218
    %v689 = vunpack.c.l.b16 %v219
    %v690 = vunpack.c.h.b16 %v219
    %v691 = vunpack.c.l.b16 %v220
    %v692 = vunpack.c.h.b16 %v220
    %v693 = vunpack.c.l.b16 %v221
    %v694 = vunpack.c.h.b16 %v221
    %v695 = vunpack.c.l.b16 %v222
    %v696 = vunpack.c.h.b16 %v222
    %v697 = vunpack.c.l.b16 %v223
    %v698 = vunpack.c.h.b16 %v223
    %v699 = vunpack.c.l.b16 %v224
    %v700 = vunpack.c.h.b16 %v224
    %v701 = vunpack.c.l.b16 %v225
    %v702 = vunpack.c.h.b16 %v225
    %v703 = vunpack.c.l.b16 %v226
    %v704 = vunpack.c.h.b16 %v226
    %v705 = vunpack.c.l.b16 %v227
    %v706 = vunpack.c.h.b16 %v227
    %v707 = vunpack.c.l.b16 %v228
    %v708 = vunpack.c.h.b16 %v228
    %v709 = vunpack.c.l.b16 %v229
    %v710 = vunpack.c.h.b16 %v229
    %v711 = vunpack.c.l.b16 %v230
    %v712 = vunpack.c.h.b16 %v230
    %v713 = vunpack.c.l.b16 %v231
    %v714 = vunpack.c.h.b16 %v231
    %v715 = vunpack.c.l.b16 %v232
    %v716 = vunpack.c.h.b16 %v232
    %v717 = vunpack.c.l.b16 %v233
    %v718 = vunpack.c.h.b16 %v233
    %v719 = vunpack.c.l.b16 %v234
    %v720 = vunpack.c.h.b16 %v234
    %v721 = vunpack.c.l.b16 %v235
    %v722 = vunpack.c.h.b16 %v235
    %v723 = vunpack.c.l.b16 %v236
    %v724 = vunpack.c.h.b16 %v236
    %v725 = vunpack.c.l.b16 %v237
    %v726 = vunpack.c.h.b16 %v237
    %v727 = vunpack.c.l.b16 %v238
    %v728 = vunpack.c.h.b16 %v238
    %v729 = vunpack.c.l.b16 %v239
    %v730 = vunpack.c.h.b16 %v239
    %v731 = vunpack.c.l.b16 %v240
    %v732 = vunpack.c.h.b16 %v240
    %v733 = vunpack.c.l.b16 %v241
    %v734 = vunpack.c.h.b16 %v241
    %v735 = vunpack.c.l.b16 %v242
    %v736 = vunpack.c.h.b16 %v242
    %v737 = vunpack.c.l.b16 %v243
    %v738 = vunpack.c.h.b16 %v243
    %v739 = vunpack.c.l.b16 %v244
    %v740 = vunpack.c.h.b16 %v244
    %v741 = vunpack.c.l.b16 %v245
    %v742 = vunpack.c.h.b16 %v245
    %v743 = vunpack.c.l.b16 %v246
    %v744 = vunpack.c.h.b16 %v246
    %v745 = vunpack.c.l.b16 %v247
    %v746 = vunpack.c.h.b16 %v247
    %v747 = vunpack.c.l.b16 %v248
    %v748 = vunpack.c.h.b16 %v248
    %v749 = vunpack.c.l.b16 %v249
    %v750 = vunpack.c.h.b16 %v249
    %v751 = vunpack.c.l.b16 %v250
    %v752 = vunpack.c.h.b16 %v250
    %v753 = vunpack.c.l.b16 %v251
    %v754 = vunpack.c.h.b16 %v251
    %v755 = vunpack.c.l.b16 %v252
    %v756 = vunpack.c.h.b16 %v252
    %v757 = vunpack.c.l.b16 %v253
    %v758 = vunpack.c.h.b16 %v253
    %v759 = vunpack.c.l.b16 %v254
    %v760 = vunpack.c.h.b16 %v254
    %v761 = vunpack.c.l.b16 %v255
    %v762 = vunpack.c.h.b16 %v255
    %v763 = vunpack.c.l.b16 %v256
    %v764 = vunpack.c.h.b16 %v256
    %v765 = vunpack.c.l.b16 %v257
    %v766 = vunpack.c.h.b16 %v257
    %v767 = vunpack.c.l.b16 %v258
    %v768 = vunpack.c.h.b16 %v258
    %v769 = vunpack.c.l.b16 %v259
    %v770 = vunpack.c.h.b16 %v259
    %v771 = vunpack.c.l.b16 %v260
    %v772 = vunpack.c.h.b16 %v260
    %v773 = vunpack.c.l.b16 %v261
    %v774 = vunpack.c.h.b16 %v261
    %v775 = vunpack.c.l.b16 %v262
    %v776 = vunpack.c.h.b16 %v262
    %v777 = vunpack.c.l.b16 %v263
    %v778 = vunpack.c.h.b16 %v263
    %v779 = vunpack.c.l.b16 %v264
    %v780 = vunpack.c.h.b16 %v264
    %v781 = vunpack.c.l.b16 %v265
    %v782 = vunpack.c.h.b16 %v265
    %v783 = vunpack.c.l.b16 %v266
    %v784 = vunpack.c.h.b16 %v266
    %v785 = vunpack.c.l.b16 %v267
    %v786 = vunpack.c.h.b16 %v267
    %v787 = vunpack.c.l.b16 %v268
    %v788 = vunpack.c.h.b16 %v268
    %v789 = vunpack.c.l.b16 %v269
    %v790 = vunpack.c.h.b16 %v269
    %v791 = vunpack.c.l.b16 %v270
    %v792 = vunpack.c.h.b16 %v270
    %v793 = vunpack.c.l.b16 %v271
    %v794 = vunpack.c.h.b16 %v271
    %v795 = vunpack.c.l.b16 %v272
    %v796 = vunpack.c.h.b16 %v272
    %v797 = vunpack.c.l.b16 %v273
    %v798 = vunpack.c.h.b16 %v273
    %v799 = vunpack.c.l.b16 %v274
    %v800 = vunpack.c.h.b16 %v274
    %v801 = vunpack.c.l.b16 %v275
    %v802 = vunpack.c.h.b16 %v275
    %v803 = vunpack.c.l.b16 %v276
    %v804 = vunpack.c.h.b16 %v276
    %v805 = vunpack.c.l.b16 %v277
    %v806 = vunpack.c.h.b16 %v277
    %v807 = vunpack.c.l.b16 %v278
    %v808 = vunpack.c.h.b16 %v278
    %v809 = vunpack.c.l.b16 %v279
    %v810 = vunpack.c.h.b16 %v279
    %v811 = vunpack.c.l.b16 %v280
    %v812 = vunpack.c.h.b16 %v280
    %v813 = vunpack.c.l.b16 %v281
    %v814 = vunpack.c.h.b16 %v281
    %v815 = vunpack.c.l.b16 %v282
    %v816 = vunpack.c.h.b16 %v282
    %v817 = vunpack.c.l.b16 %v283
    %v818 = vunpack.c.h.b16 %v283
    %v819 = vunpack.c.l.b16 %v284
    %v820 = vunpack.c.h.b16 %v284
    %v821 = vunpack.c.l.b16 %v285
    %v822 = vunpack.c.h.b16 %v285
    %v823 = vunpack.c.l.b16 %v286
    %v824 = vunpack.c.h.b16 %v286
    %v825 = vunpack.c.l.b16 %v287
    %v826 = vunpack.c.h.b16 %v287
    %v827 = vunpack.c.l.b16 %v288
    %v828 = vunpack.c.h.b16 %v288
    %v829 = vunpack.c.l.b16 %v289
    %v830 = vunpack.c.h.b16 %v289
    %v831 = vunpack.c.l.b16 %v290
    %v832 = vunpack.c.h.b16 %v290
    %v833 = vunpack.c.l.b16 %v291
    %v834 = vunpack.c.h.b16 %v291
    %v835 = vunpack.c.l.b16 %v292
    %v836 = vunpack.c.h.b16 %v292
    %v837 = vunpack.c.l.b16 %v293
    %v838 = vunpack.c.h.b16 %v293
    %v839 = vunpack.c.l.b16 %v294
    %v840 = vunpack.c.h.b16 %v294
    %v841 = vunpack.c.l.b16 %v295
    %v842 = vunpack.c.h.b16 %v295
    %v843 = vunpack.c.l.b16 %v296
    %v844 = vunpack.c.h.b16 %v296
    %v845 = vunpack.c.l.b16 %v297
    %v846 = vunpack.c.h.b16 %v297
    %v847 = vunpack.c.l.b16 %v298
    %v848 = vunpack.c.h.b16 %v298
    %v849 = vunpack.c.l.b16 %v299
    %v850 = vunpack.c.h.b16 %v299
    %v851 = vunpack.c.l.b16 %v300
    %v852 = vunpack.c.h.b16 %v300
    %v853 = vunpack.c.l.b16 %v301
    %v854 = vunpack.c.h.b16 %v301
    %v855 = vunpack.c.l.b16 %v302
    %v856 = vunpack.c.h.b16 %v302
    %v857 = vunpack.c.l.b16 %v303
    %v858 = vunpack.c.h.b16 %v303
    %v859 = vunpack.c.l.b16 %v304
    %v860 = vunpack.c.h.b16 %v304
    %v861 = vunpack.c.l.b16 %v305
    %v862 = vunpack.c.h.b16 %v305
    %v863 = vunpack.c.l.b16 %v306
    %v864 = vunpack.c.h.b16 %v306
    %v865 = vunpack.c.l.b16 %v307
    %v866 = vunpack.c.h.b16 %v307
    %v867 = vunpack.c.l.b16 %v308
    %v868 = vunpack.c.h.b16 %v308
    %v869 = vunpack.c.l.b16 %v309
    %v870 = vunpack.c.h.b16 %v309
    %v871 = vunpack.c.l.b16 %v310
    %v872 = vunpack.c.h.b16 %v310
    %v873 = vunpack.c.l.b16 %v311
    %v874 = vunpack.c.h.b16 %v311
    %v875 = vunpack.c.l.b16 %v312
    %v876 = vunpack.c.h.b16 %v312
    %v877 = vunpack.c.l.b16 %v313
    %v878 = vunpack.c.h.b16 %v313
    %v879 = vunpack.c.l.b16 %v314
    %v880 = vunpack.c.h.b16 %v314
    %v881 = vunpack.c.l.b16 %v315
    %v882 = vunpack.c.h.b16 %v315
    %v883 = vunpack.c.l.b16 %v316
    %v884 = vunpack.c.h.b16 %v316
    %v885 = vunpack.c.l.b16 %v317
    %v886 = vunpack.c.h.b16 %v317
    %v887 = vunpack.c.l.b16 %v318
    %v888 = vunpack.c.h.b16 %v318
    %v889 = vunpack.c.l.b16 %v319
    %v890 = vunpack.c.h.b16 %v319
    %v891 = vunpack.c.l.b16 %v320
    %v892 = vunpack.c.h.b16 %v320
    %v893 = vunpack.c.l.b16 %v321
    %v894 = vunpack.c.h.b16 %v321
    %v895 = vunpack.c.l.b16 %v322
    %v896 = vunpack.c.h.b16 %v322
    %v897 = vunpack.c.l.b16 %v323
    %v898 = vunpack.c.h.b16 %v323
    %v899 = vunpack.c.l.b16 %v324
    %v900 = vunpack.c.h.b16 %v324
    %v901 = vunpack.c.l.b16 %v325
    %v902 = vunpack.c.h.b16 %v325
    %v903 = vunpack.c.l.b16 %v326
    %v904 = vunpack.c.h.b16 %v326
    %v905 = vunpack.c.l.b16 %v327
    %v906 = vunpack.c.h.b16 %v327
    %v907 = vunpack.c.l.b16 %v328
    %v908 = vunpack.c.h.b16 %v328
    %v909 = vunpack.c.l.b16 %v329
    %v910 = vunpack.c.h.b16 %v329
    %v911 = vunpack.c.l.b16 %v330
    %v912 = vunpack.c.h.b16 %v330
    %v913 = vunpack.c.l.b16 %v331
    %v914 = vunpack.c.h.b16 %v331
    %v915 = vunpack.c.l.b16 %v332
    %v916 = vunpack.c.h.b16 %v332
    %v917 = vunpack.c.l.b16 %v333
    %v918 = vunpack.c.h.b16 %v333
    %v919 = vunpack.c.l.b16 %v334
    %v920 = vunpack.c.h.b16 %v334
    %v921 = vunpack.c.l.b16 %v335
    %v922 = vunpack.c.h.b16 %v335
    %v923 = vunpack.c.l.b16 %v336
    %v924 = vunpack.c.h.b16 %v336
    %v925 = vunpack.c.l.b16 %v337
    %v926 = vunpack.c.h.b16 %v337
    %v927 = vunpack.c.l.b16 %v338
    %v928 = vunpack.c.h.b16 %v338
    %v929 = vunpack.c.l.b16 %v339
    %v930 = vunpack.c.h.b16 %v339
    %v931 = vunpack.c.l.b16 %v340
    %v932 = vunpack.c.h.b16 %v340
    %v933 = vunpack.c.l.b16 %v341
    %v934 = vunpack.c.h.b16 %v341
    %v935 = vunpack.c.l.b16 %v342
    %v936 = vunpack.c.h.b16 %v342
    %v937 = vunpack.c.l.b16 %v343
    %v938 = vunpack.c.h.b16 %v343
    %v939 = vunpack.c.l.b16 %v344
    %v940 = vunpack.c.h.b16 %v344
    %v941 = vunpack.c.l.b16 %v345
    %v942 = vunpack.c.h.b16 %v345
    %v943 = vunpack.c.l.b16 %v346
    %v944 = vunpack.c.h.b16 %v346
    %v945 = vpack.c.b16 %v557, %v553
    %v946 = vpack.c.b16 %v558, %v554
    %v947 = vpack.c.b16 %v559, %v555
    %v948 = vpack.c.b16 %v560, %v556
    %v949 = vpack.c.b16 %v565, %v561
    %v950 = vpack.c.b16 %v566, %v562
    %v951 = vpack.c.b16 %v567, %v563
    %v952 = vpack.c.b16 %v568, %v564
    %v953 = vpack.c.b16 %v573, %v569
    %v954 = vpack.c.b16 %v574, %v570
    %v955 = vpack.c.b16 %v575, %v571
    %v956 = vpack.c.b16 %v576, %v572
    %v957 = vpack.c.b16 %v581, %v577
    %v958 = vpack.c.b16 %v582, %v578
    %v959 = vpack.c.b16 %v583, %v579
    %v960 = vpack.c.b16 %v584, %v580
    %v961 = vpack.c.b16 %v589, %v585
    %v962 = vpack.c.b16 %v590, %v586
    %v963 = vpack.c.b16 %v591, %v587
    %v964 = vpack.c.b16 %v592, %v588
    %v965 = vpack.c.b16 %v597, %v593
    %v966 = vpack.c.b16 %v598, %v594
    %v967 = vpack.c.b16 %v599, %v595
    %v968 = vpack.c.b16 %v600, %v596
    %v969 = vpack.c.b16 %v605, %v601
    %v970 = vpack.c.b16 %v606, %v602
    %v971 = vpack.c.b16 %v607, %v603
    %v972 = vpack.c.b16 %v608, %v604
    %v973 = vpack.c.b16 %v613, %v609
    %v974 = vpack.c.b16 %v614, %v610
    %v975 = vpack.c.b16 %v615, %v611
    %v976 = vpack.c.b16 %v616, %v612
    %v977 = vpack.c.b16 %v621, %v617
    %v978 = vpack.c.b16 %v622, %v618
    %v979 = vpack.c.b16 %v623, %v619
    %v980 = vpack.c.b16 %v624, %v620
    %v981 = vpack.c.b16 %v629, %v625
    %v982 = vpack.c.b16 %v630, %v626
    %v983 = vpack.c.b16 %v631, %v627
    %v984 = vpack.c.b16 %v632, %v628
    %v985 = vpack.c.b16 %v637, %v633
    %v986 = vpack.c.b16 %v638, %v634
    %v987 = vpack.c.b16 %v639, %v635
    %v988 = vpack.c.b16 %v640, %v636
    %v989 = vpack.c.b16 %v645, %v641
    %v990 = vpack.c.b16 %v646, %v642
    %v991 = vpack.c.b16 %v647, %v643
    %v992 = vpack.c.b16 %v648, %v644
    %v993 = vpack.c.b16 %v653, %v649
    %v994 = vpack.c.b16 %v654, %v650
    %v995 = vpack.c.b16 %v655, %v651
    %v996 = vpack.c.b16 %v656, %v652
    %v997 = vpack.c.b16 %v661, %v657
    %v998 = vpack.c.b16 %v662, %v658
    %v999 = vpack.c.b16 %v663, %v659
    %v1000 = vpack.c.b16 %v664, %v660
    %v1001 = vpack.c.b16 %v669, %v665
    %v1002 = vpack.c.b16 %v670, %v666
    %v1003 = vpack.c.b16 %v671, %v667
    %v1004 = vpack.c.b16 %v672, %v668
    %v1005 = vpack.c.b16 %v677, %v673
    %v1006 = vpack.c.b16 %v678, %v674
    %v1007 = vpack.c.b16 %v679, %v675
    %v1008 = vpack.c.b16 %v680, %v676
    %v1009 = vpack.c.b16 %v685, %v681
    %v1010 = vpack.c.b16 %v686, %v682
    %v1011 = vpack.c.b16 %v687, %v683
    %v1012 = vpack.c.b16 %v688, %v684
    %v1013 = vpack.c.b16 %v693, %v689
    %v1014 = vpack.c.b16 %v694, %v690
    %v1015 = vpack.c.b16 %v695, %v691
    %v1016 = vpack.c.b16 %v696, %v692
    %v1017 = vpack.c.b16 %v701, %v697
    %v1018 = vpack.c.b16 %v702, %v698
    %v1019 = vpack.c.b16 %v703, %v699
    %v1020 = vpack.c.b16 %v704, %v700
    %v1021 = vpack.c.b16 %v709, %v705
    %v1022 = vpack.c.b16 %v710, %v706
    %v1023 = vpack.c.b16 %v711, %v707
    %v1024 = vpack.c.b16 %v712, %v708
    %v1025 = vpack.c.b16 %v717, %v713
    %v1026 = vpack.c.b16 %v718, %v714
    %v1027 = vpack.c.b16 %v719, %v715
    %v1028 = vpack.c.b16 %v720, %v716
    %v1029 = vpack.c.b16 %v725, %v721
    %v1030 = vpack.c.b16 %v726, %v722
    %v1031 = vpack.c.b16 %v727, %v723
    %v1032 = vpack.c.b16 %v728, %v724
    %v1033 = vpack.c.b16 %v733, %v729
    %v1034 = vpack.c.b16 %v734, %v730
    %v1035 = vpack.c.b16 %v735, %v731
    %v1036 = vpack.c.b16 %v736, %v732
    %v1037 = vpack.c.b16 %v741, %v737
    %v1038 = vpack.c.b16 %v742, %v738
    %v1039 = vpack.c.b16 %v743, %v739
    %v1040 = vpack.c.b16 %v744, %v740
    %v1041 = vpack.c.b16 %v749, %v745
    %v1042 = vpack.c.b16 %v750, %v746
    %v1043 = vpack.c.b16 %v751, %v747
    %v1044 = vpack.c.b16 %v752, %v748
    %v1045 = vpack.c.b16 %v757, %v753
    %v1046 = vpack.c.b16 %v758, %v754
    %v1047 = vpack.c.b16 %v759, %v755
    %v1048 = vpack.c.b16 %v760, %v756
    %v1049 = vpack.c.b16 %v765, %v761
    %v1050 = vpack.c.b16 %v766, %v762
    %v1051 = vpack.c.b16 %v767, %v763
    %v1052 = vpack.c.b16 %v768, %v764
    %v1053 = vpack.c.b16 %v773, %v769
    %v1054 = vpack.c.b16 %v774, %v770
    %v1055 = vpack.c.b16 %v775, %v771
    %v1056 = vpack.c.b16 %v776, %v772
    %v1057 = vpack.c.b16 %v781, %v777
    %v1058 = vpack.c.b16 %v782, %v778
    %v1059 = vpack.c.b16 %v783, %v779
    %v1060 = vpack.c.b16 %v784, %v780
    %v1061 = vpack.c.b16 %v789, %v785
    %v1062 = vpack.c.b16 %v790, %v786
    %v1063 = vpack.c.b16 %v791, %v787
    %v1064 = vpack.c.b16 %v792, %v788
    %v1065 = vpack.c.b16 %v797, %v793
    %v1066 = vpack.c.b16 %v798, %v794
    %v1067 = vpack.c.b16 %v799, %v795
    %v1068 = vpack.c.b16 %v800, %v796
    %v1069 = vpack.c.b16 %v805, %v801
    %v1070 = vpack.c.b16 %v806, %v802
    %v1071 = vpack.c.b16 %v807, %v803
    %v1072 = vpack.c.b16 %v808, %v804
    %v1073 = vpack.c.b16 %v813, %v809
    %v1074 = vpack.c.b16 %v814, %v810
    %v1075 = vpack.c.b16 %v815, %v811
    %v1076 = vpack.c.b16 %v816, %v812
    %v1077 = vpack.c.b16 %v821, %v817
    %v1078 = vpack.c.b16 %v822, %v818
    %v1079 = vpack.c.b16 %v823, %v819
    %v1080 = vpack.c.b16 %v824, %v820
    %v1081 = vpack.c.b16 %v829, %v825
    %v1082 = vpack.c.b16 %v830, %v826
    %v1083 = vpack.c.b16 %v831, %v827
    %v1084 = vpack.c.b16 %v832, %v828
    %v1085 = vpack.c.b16 %v837, %v833
    %v1086 = vpack.c.b16 %v838, %v834
    %v1087 = vpack.c.b16 %v839, %v835
    %v1088 = vpack.c.b16 %v840, %v836
    %v1089 = vpack.c.b16 %v845, %v841
    %v1090 = vpack.c.b16 %v846, %v842
    %v1091 = vpack.c.b16 %v847, %v843
    %v1092 = vpack.c.b16 %v848, %v844
    %v1093 = vpack.c.b16 %v853, %v849
    %v1094 = vpack.c.b16 %v854, %v850
    %v1095 = vpack.c.b16 %v855, %v851
    %v1096 = vpack.c.b16 %v856, %v852
    %v1097 = vpack.c.b16 %v861, %v857
    %v1098 = vpack.c.b16 %v862, %v858
    %v1099 = vpack.c.b16 %v863, %v859
    %v1100 = vpack.c.b16 %v864, %v860
    %v1101 = vpack.c.b16 %v869, %v865
    %v1102 = vpack.c.b16 %v870, %v866
    %v1103 = vpack.c.b16 %v871, %v867
    %v1104 = vpack.c.b16 %v872, %v868
    %v1105 = vpack.c.b16 %v877, %v873
    %v1106 = vpack.c.b16 %v878, %v874
    %v1107 = vpack.c.b16 %v879, %v875
    %v1108 = vpack.c.b16 %v880, %v876
    %v1109 = vpack.c.b16 %v885, %v881
    %v1110 = vpack.c.b16 %v886, %v882
    %v1111 = vpack.c.b16 %v887, %v883
    %v1112 = vpack.c.b16 %v888, %v884
    %v1113 = vpack.c.b16 %v893, %v889
    %v1114 = vpack.c.b16 %v894, %v890
    %v1115 = vpack.c.b16 %v895, %v891
    %v1116 = vpack.c.b16 %v896, %v892
    %v1117 = vpack.c.b16 %v901, %v897
    %v1118 = vpack.c.b16 %v902, %v898
    %v1119 = vpack.c.b16 %v903, %v899
    %v1120 = vpack.c.b16 %v904, %v900
    %v1121 = vpack.c.b16 %v909, %v905
    %v1122 = vpack.c.b16 %v910, %v906
    %v1123 = vpack.c.b16 %v911, %v907
    %v1124 = vpack.c.b16 %v912, %v908
    %v1125 = vpack.c.b16 %v917, %v913
    %v1126 = vpack.c.b16 %v918, %v914
    %v1127 = vpack.c.b16 %v919, %v915
    %v1128 = vpack.c.b16 %v920, %v916
    %v1129 = vpack.c.b16 %v925, %v921
    %v1130 = vpack.c.b16 %v926, %v922
    %v1131 = vpack.c.b16 %v927, %v923
    %v1132 = vpack.c.b16 %v928, %v924
    %v1133 = vpack.c.b16 %v933, %v929
    %v1134 = vpack.c.b16 %v934, %v930
    %v1135 = vpack.c.b16 %v935, %v931
    %v1136 = vpack.c.b16 %v936, %v932
    %v1137 = vpack.c.b16 %v941, %v937
    %v1138 = vpack.c.b16 %v942, %v938
    %v1139 = vpack.c.b16 %v943, %v939
    %v1140 = vpack.c.b16 %v944, %v940
    %vm1337 = vcmask 130048
    %v1339 = vsel %vm1337, %v150, 0
    %1341 = vmatpush.bf16.msra.mxu0 %v973
    %1342 = vmatpush.bf16.msra.mxu0 %v969
    %1343 = vmatpush.bf16.msra.mxu0 %v965
    %1344 = vmatpush.bf16.msra.mxu0 %v961
    %1345 = vmatpush.bf16.msra.mxu0 %v957
    %1346 = vmatpush.bf16.msra.mxu0 %v953
    %1347 = vmatpush.bf16.msra.mxu0 %v949
    %1348 = vmatpush.bf16.msra.mxu0 %v945
    %1349 = vmatmul.bf16.gmra.mxu0 %v144
    %v1350 = vpop.f32.mrf.mxu0
    %v1351 = vadd.f32 %v349, %v1350
    %v1352 = vpop.f32.mrf.mxu0
    %1353 = vdwg.mxu0
    %1354 = vmatpush.bf16.msra.mxu0 %v1005
    %1355 = vmatpush.bf16.msra.mxu0 %v1001
    %1356 = vmatpush.bf16.msra.mxu0 %v997
    %1357 = vmatpush.bf16.msra.mxu0 %v993
    %1358 = vmatpush.bf16.msra.mxu0 %v989
    %1359 = vmatpush.bf16.msra.mxu0 %v985
    %1360 = vmatpush.bf16.msra.mxu0 %v981
    %1361 = vmatpush.bf16.msra.mxu0 %v977
    %1362 = vmatmul.bf16.gmra.mxu0 %v145
    %v1363 = vpop.f32.mrf.mxu0
    %v1364 = vadd.f32 %v1351, %v1363
    %v1365 = vpop.f32.mrf.mxu0
    %1366 = vdwg.mxu0
    %1367 = vmatpush.bf16.msra.mxu0 %v1037
    %1368 = vmatpush.bf16.msra.mxu0 %v1033
    %1369 = vmatpush.bf16.msra.mxu0 %v1029
    %1370 = vmatpush.bf16.msra.mxu0 %v1025
    %1371 = vmatpush.bf16.msra.mxu0 %v1021
    %1372 = vmatpush.bf16.msra.mxu0 %v1017
    %1373 = vmatpush.bf16.msra.mxu0 %v1013
    %1374 = vmatpush.bf16.msra.mxu0 %v1009
    %1375 = vmatmul.bf16.gmra.mxu0 %v146
    %v1376 = vpop.f32.mrf.mxu0
    %v1377 = vadd.f32 %v1364, %v1376
    %v1378 = vpop.f32.mrf.mxu0
    %1379 = vdwg.mxu0
    %1380 = vmatpush.bf16.msra.mxu0 %v1069
    %1381 = vmatpush.bf16.msra.mxu0 %v1065
    %1382 = vmatpush.bf16.msra.mxu0 %v1061
    %1383 = vmatpush.bf16.msra.mxu0 %v1057
    %1384 = vmatpush.bf16.msra.mxu0 %v1053
    %1385 = vmatpush.bf16.msra.mxu0 %v1049
    %1386 = vmatpush.bf16.msra.mxu0 %v1045
    %1387 = vmatpush.bf16.msra.mxu0 %v1041
    %1388 = vmatmul.bf16.gmra.mxu0 %v147
    %v1389 = vpop.f32.mrf.mxu0
    %v1390 = vadd.f32 %v1377, %v1389
    %v1391 = vpop.f32.mrf.mxu0
    %1392 = vdwg.mxu0
    %1393 = vmatpush.bf16.msra.mxu0 %v1101
    %1394 = vmatpush.bf16.msra.mxu0 %v1097
    %1395 = vmatpush.bf16.msra.mxu0 %v1093
    %1396 = vmatpush.bf16.msra.mxu0 %v1089
    %1397 = vmatpush.bf16.msra.mxu0 %v1085
    %1398 = vmatpush.bf16.msra.mxu0 %v1081
    %1399 = vmatpush.bf16.msra.mxu0 %v1077
    %1400 = vmatpush.bf16.msra.mxu0 %v1073
    %1401 = vmatmul.bf16.gmra.mxu0 %v148
    %v1402 = vpop.f32.mrf.mxu0
    %v1403 = vadd.f32 %v1390, %v1402
    %v1404 = vpop.f32.mrf.mxu0
    %1405 = vdwg.mxu0
    %1406 = vmatpush.bf16.msra.mxu0 %v1133
    %1407 = vmatpush.bf16.msra.mxu0 %v1129
    %1408 = vmatpush.bf16.msra.mxu0 %v1125
    %1409 = vmatpush.bf16.msra.mxu0 %v1121
    %1410 = vmatpush.bf16.msra.mxu0 %v1117
    %1411 = vmatpush.bf16.msra.mxu0 %v1113
    %1412 = vmatpush.bf16.msra.mxu0 %v1109
    %1413 = vmatpush.bf16.msra.mxu0 %v1105
    %1414 = vmatmul.bf16.gmra.mxu0 %v149
    %v1415 = vpop.f32.mrf.mxu0
    %v1416 = vadd.f32 %v1403, %v1415
    %v1417 = vpop.f32.mrf.mxu0
    %1418 = vdwg.mxu0
    %1419 = vmatpush.bf16.msra.mxu0 0
    %1420 = vmatpush.bf16.msra.mxu0 0
    %1421 = vmatpush.bf16.msra.mxu0 0
    %1422 = vmatpush.bf16.msra.mxu0 0
    %1423 = vmatpush.bf16.msra.mxu0 0
    %1424 = vmatpush.bf16.msra.mxu0 0
    %1425 = vmatpush.bf16.msra.mxu0 0
    %1426 = vmatpush.bf16.msra.mxu0 %v1137
    %1427 = vmatmul.bf16.gmra.mxu0 %v1339
    %v1428 = vpop.f32.mrf.mxu0
    %v1429 = vadd.f32 %v1416, %v1428
    %v1430 = vpop.f32.mrf.mxu0
    %1431 = vdwg.mxu0
    %1432 = vmatpush.bf16.msra.mxu0 %v974
    %1433 = vmatpush.bf16.msra.mxu0 %v970
    %1434 = vmatpush.bf16.msra.mxu0 %v966
    %1435 = vmatpush.bf16.msra.mxu0 %v962
    %1436 = vmatpush.bf16.msra.mxu0 %v958
    %1437 = vmatpush.bf16.msra.mxu0 %v954
    %1438 = vmatpush.bf16.msra.mxu0 %v950
    %1439 = vmatpush.bf16.msra.mxu0 %v946
    %1440 = vmatmul.bf16.gmra.mxu0 %v144
    %v1441 = vpop.f32.mrf.mxu0
    %v1442 = vadd.f32 %v350, %v1441
    %v1443 = vpop.f32.mrf.mxu0
    %1444 = vdwg.mxu0
    %1445 = vmatpush.bf16.msra.mxu0 %v1006
    %1446 = vmatpush.bf16.msra.mxu0 %v1002
    %1447 = vmatpush.bf16.msra.mxu0 %v998
    %1448 = vmatpush.bf16.msra.mxu0 %v994
    %1449 = vmatpush.bf16.msra.mxu0 %v990
    %1450 = vmatpush.bf16.msra.mxu0 %v986
    %1451 = vmatpush.bf16.msra.mxu0 %v982
    %1452 = vmatpush.bf16.msra.mxu0 %v978
    %1453 = vmatmul.bf16.gmra.mxu0 %v145
    %v1454 = vpop.f32.mrf.mxu0
    %v1455 = vadd.f32 %v1442, %v1454
    %v1456 = vpop.f32.mrf.mxu0
    %1457 = vdwg.mxu0
    %1458 = vmatpush.bf16.msra.mxu0 %v1038
    %1459 = vmatpush.bf16.msra.mxu0 %v1034
    %1460 = vmatpush.bf16.msra.mxu0 %v1030
    %1461 = vmatpush.bf16.msra.mxu0 %v1026
    %1462 = vmatpush.bf16.msra.mxu0 %v1022
    %1463 = vmatpush.bf16.msra.mxu0 %v1018
    %1464 = vmatpush.bf16.msra.mxu0 %v1014
    %1465 = vmatpush.bf16.msra.mxu0 %v1010
    %1466 = vmatmul.bf16.gmra.mxu0 %v146
    %v1467 = vpop.f32.mrf.mxu0
    %v1468 = vadd.f32 %v1455, %v1467
    %v1469 = vpop.f32.mrf.mxu0
    %1470 = vdwg.mxu0
    %1471 = vmatpush.bf16.msra.mxu0 %v1070
    %1472 = vmatpush.bf16.msra.mxu0 %v1066
    %1473 = vmatpush.bf16.msra.mxu0 %v1062
    %1474 = vmatpush.bf16.msra.mxu0 %v1058
    %1475 = vmatpush.bf16.msra.mxu0 %v1054
    %1476 = vmatpush.bf16.msra.mxu0 %v1050
    %1477 = vmatpush.bf16.msra.mxu0 %v1046
    %1478 = vmatpush.bf16.msra.mxu0 %v1042
    %1479 = vmatmul.bf16.gmra.mxu0 %v147
    %v1480 = vpop.f32.mrf.mxu0
    %v1481 = vadd.f32 %v1468, %v1480
    %v1482 = vpop.f32.mrf.mxu0
    %1483 = vdwg.mxu0
    %1484 = vmatpush.bf16.msra.mxu0 %v1102
    %1485 = vmatpush.bf16.msra.mxu0 %v1098
    %1486 = vmatpush.bf16.msra.mxu0 %v1094
    %1487 = vmatpush.bf16.msra.mxu0 %v1090
    %1488 = vmatpush.bf16.msra.mxu0 %v1086
    %1489 = vmatpush.bf16.msra.mxu0 %v1082
    %1490 = vmatpush.bf16.msra.mxu0 %v1078
    %1491 = vmatpush.bf16.msra.mxu0 %v1074
    %1492 = vmatmul.bf16.gmra.mxu0 %v148
    %v1493 = vpop.f32.mrf.mxu0
    %v1494 = vadd.f32 %v1481, %v1493
    %v1495 = vpop.f32.mrf.mxu0
    %1496 = vdwg.mxu0
    %1497 = vmatpush.bf16.msra.mxu0 %v1134
    %1498 = vmatpush.bf16.msra.mxu0 %v1130
    %1499 = vmatpush.bf16.msra.mxu0 %v1126
    %1500 = vmatpush.bf16.msra.mxu0 %v1122
    %1501 = vmatpush.bf16.msra.mxu0 %v1118
    %1502 = vmatpush.bf16.msra.mxu0 %v1114
    %1503 = vmatpush.bf16.msra.mxu0 %v1110
    %1504 = vmatpush.bf16.msra.mxu0 %v1106
    %1505 = vmatmul.bf16.gmra.mxu0 %v149
    %v1506 = vpop.f32.mrf.mxu0
    %v1507 = vadd.f32 %v1494, %v1506
    %v1508 = vpop.f32.mrf.mxu0
    %1509 = vdwg.mxu0
    %1510 = vmatpush.bf16.msra.mxu0 0
    %1511 = vmatpush.bf16.msra.mxu0 0
    %1512 = vmatpush.bf16.msra.mxu0 0
    %1513 = vmatpush.bf16.msra.mxu0 0
    %1514 = vmatpush.bf16.msra.mxu0 0
    %1515 = vmatpush.bf16.msra.mxu0 0
    %1516 = vmatpush.bf16.msra.mxu0 0
    %1517 = vmatpush.bf16.msra.mxu0 %v1138
    %1518 = vmatmul.bf16.gmra.mxu0 %v1339
    %v1519 = vpop.f32.mrf.mxu0
    %v1520 = vadd.f32 %v1507, %v1519
    %v1521 = vpop.f32.mrf.mxu0
    %1522 = vdwg.mxu0
    %1523 = vmatpush.bf16.msra.mxu0 %v975
    %1524 = vmatpush.bf16.msra.mxu0 %v971
    %1525 = vmatpush.bf16.msra.mxu0 %v967
    %1526 = vmatpush.bf16.msra.mxu0 %v963
    %1527 = vmatpush.bf16.msra.mxu0 %v959
    %1528 = vmatpush.bf16.msra.mxu0 %v955
    %1529 = vmatpush.bf16.msra.mxu0 %v951
    %1530 = vmatpush.bf16.msra.mxu0 %v947
    %1531 = vmatmul.bf16.gmra.mxu0 %v144
    %v1532 = vpop.f32.mrf.mxu0
    %v1533 = vadd.f32 %v351, %v1532
    %v1534 = vpop.f32.mrf.mxu0
    %1535 = vdwg.mxu0
    %1536 = vmatpush.bf16.msra.mxu0 %v1007
    %1537 = vmatpush.bf16.msra.mxu0 %v1003
    %1538 = vmatpush.bf16.msra.mxu0 %v999
    %1539 = vmatpush.bf16.msra.mxu0 %v995
    %1540 = vmatpush.bf16.msra.mxu0 %v991
    %1541 = vmatpush.bf16.msra.mxu0 %v987
    %1542 = vmatpush.bf16.msra.mxu0 %v983
    %1543 = vmatpush.bf16.msra.mxu0 %v979
    %1544 = vmatmul.bf16.gmra.mxu0 %v145
    %v1545 = vpop.f32.mrf.mxu0
    %v1546 = vadd.f32 %v1533, %v1545
    %v1547 = vpop.f32.mrf.mxu0
    %1548 = vdwg.mxu0
    %1549 = vmatpush.bf16.msra.mxu0 %v1039
    %1550 = vmatpush.bf16.msra.mxu0 %v1035
    %1551 = vmatpush.bf16.msra.mxu0 %v1031
    %1552 = vmatpush.bf16.msra.mxu0 %v1027
    %1553 = vmatpush.bf16.msra.mxu0 %v1023
    %1554 = vmatpush.bf16.msra.mxu0 %v1019
    %1555 = vmatpush.bf16.msra.mxu0 %v1015
    %1556 = vmatpush.bf16.msra.mxu0 %v1011
    %1557 = vmatmul.bf16.gmra.mxu0 %v146
    %v1558 = vpop.f32.mrf.mxu0
    %v1559 = vadd.f32 %v1546, %v1558
    %v1560 = vpop.f32.mrf.mxu0
    %1561 = vdwg.mxu0
    %1562 = vmatpush.bf16.msra.mxu0 %v1071
    %1563 = vmatpush.bf16.msra.mxu0 %v1067
    %1564 = vmatpush.bf16.msra.mxu0 %v1063
    %1565 = vmatpush.bf16.msra.mxu0 %v1059
    %1566 = vmatpush.bf16.msra.mxu0 %v1055
    %1567 = vmatpush.bf16.msra.mxu0 %v1051
    %1568 = vmatpush.bf16.msra.mxu0 %v1047
    %1569 = vmatpush.bf16.msra.mxu0 %v1043
    %1570 = vmatmul.bf16.gmra.mxu0 %v147
    %v1571 = vpop.f32.mrf.mxu0
    %v1572 = vadd.f32 %v1559, %v1571
    %v1573 = vpop.f32.mrf.mxu0
    %1574 = vdwg.mxu0
    %1575 = vmatpush.bf16.msra.mxu0 %v1103
    %1576 = vmatpush.bf16.msra.mxu0 %v1099
    %1577 = vmatpush.bf16.msra.mxu0 %v1095
    %1578 = vmatpush.bf16.msra.mxu0 %v1091
    %1579 = vmatpush.bf16.msra.mxu0 %v1087
    %1580 = vmatpush.bf16.msra.mxu0 %v1083
    %1581 = vmatpush.bf16.msra.mxu0 %v1079
    %1582 = vmatpush.bf16.msra.mxu0 %v1075
    %1583 = vmatmul.bf16.gmra.mxu0 %v148
    %v1584 = vpop.f32.mrf.mxu0
    %v1585 = vadd.f32 %v1572, %v1584
    %v1586 = vpop.f32.mrf.mxu0
    %1587 = vdwg.mxu0
    %1588 = vmatpush.bf16.msra.mxu0 %v1135
    %1589 = vmatpush.bf16.msra.mxu0 %v1131
    %1590 = vmatpush.bf16.msra.mxu0 %v1127
    %1591 = vmatpush.bf16.msra.mxu0 %v1123
    %1592 = vmatpush.bf16.msra.mxu0 %v1119
    %1593 = vmatpush.bf16.msra.mxu0 %v1115
    %1594 = vmatpush.bf16.msra.mxu0 %v1111
    %1595 = vmatpush.bf16.msra.mxu0 %v1107
    %1596 = vmatmul.bf16.gmra.mxu0 %v149
    %v1597 = vpop.f32.mrf.mxu0
    %v1598 = vadd.f32 %v1585, %v1597
    %v1599 = vpop.f32.mrf.mxu0
    %1600 = vdwg.mxu0
    %1601 = vmatpush.bf16.msra.mxu0 0
    %1602 = vmatpush.bf16.msra.mxu0 0
    %1603 = vmatpush.bf16.msra.mxu0 0
    %1604 = vmatpush.bf16.msra.mxu0 0
    %1605 = vmatpush.bf16.msra.mxu0 0
    %1606 = vmatpush.bf16.msra.mxu0 0
    %1607 = vmatpush.bf16.msra.mxu0 0
    %1608 = vmatpush.bf16.msra.mxu0 %v1139
    %1609 = vmatmul.bf16.gmra.mxu0 %v1339
    %v1610 = vpop.f32.mrf.mxu0
    %v1611 = vadd.f32 %v1598, %v1610
    %v1612 = vpop.f32.mrf.mxu0
    %1613 = vdwg.mxu0
    %1614 = vmatpush.bf16.msra.mxu0 %v976
    %1615 = vmatpush.bf16.msra.mxu0 %v972
    %1616 = vmatpush.bf16.msra.mxu0 %v968
    %1617 = vmatpush.bf16.msra.mxu0 %v964
    %1618 = vmatpush.bf16.msra.mxu0 %v960
    %1619 = vmatpush.bf16.msra.mxu0 %v956
    %1620 = vmatpush.bf16.msra.mxu0 %v952
    %1621 = vmatpush.bf16.msra.mxu0 %v948
    %1622 = vmatmul.bf16.gmra.mxu0 %v144
    %v1623 = vpop.f32.mrf.mxu0
    %v1624 = vadd.f32 %v352, %v1623
    %v1625 = vpop.f32.mrf.mxu0
    %1626 = vdwg.mxu0
    %1627 = vmatpush.bf16.msra.mxu0 %v1008
    %1628 = vmatpush.bf16.msra.mxu0 %v1004
    %1629 = vmatpush.bf16.msra.mxu0 %v1000
    %1630 = vmatpush.bf16.msra.mxu0 %v996
    %1631 = vmatpush.bf16.msra.mxu0 %v992
    %1632 = vmatpush.bf16.msra.mxu0 %v988
    %1633 = vmatpush.bf16.msra.mxu0 %v984
    %1634 = vmatpush.bf16.msra.mxu0 %v980
    %1635 = vmatmul.bf16.gmra.mxu0 %v145
    %v1636 = vpop.f32.mrf.mxu0
    %v1637 = vadd.f32 %v1624, %v1636
    %v1638 = vpop.f32.mrf.mxu0
    %1639 = vdwg.mxu0
    %1640 = vmatpush.bf16.msra.mxu0 %v1040
    %1641 = vmatpush.bf16.msra.mxu0 %v1036
    %1642 = vmatpush.bf16.msra.mxu0 %v1032
    %1643 = vmatpush.bf16.msra.mxu0 %v1028
    %1644 = vmatpush.bf16.msra.mxu0 %v1024
    %1645 = vmatpush.bf16.msra.mxu0 %v1020
    %1646 = vmatpush.bf16.msra.mxu0 %v1016
    %1647 = vmatpush.bf16.msra.mxu0 %v1012
    %1648 = vmatmul.bf16.gmra.mxu0 %v146
    %v1649 = vpop.f32.mrf.mxu0
    %v1650 = vadd.f32 %v1637, %v1649
    %v1651 = vpop.f32.mrf.mxu0
    %1652 = vdwg.mxu0
    %1653 = vmatpush.bf16.msra.mxu0 %v1072
    %1654 = vmatpush.bf16.msra.mxu0 %v1068
    %1655 = vmatpush.bf16.msra.mxu0 %v1064
    %1656 = vmatpush.bf16.msra.mxu0 %v1060
    %1657 = vmatpush.bf16.msra.mxu0 %v1056
    %1658 = vmatpush.bf16.msra.mxu0 %v1052
    %1659 = vmatpush.bf16.msra.mxu0 %v1048
    %1660 = vmatpush.bf16.msra.mxu0 %v1044
    %1661 = vmatmul.bf16.gmra.mxu0 %v147
    %v1662 = vpop.f32.mrf.mxu0
    %v1663 = vadd.f32 %v1650, %v1662
    %v1664 = vpop.f32.mrf.mxu0
    %1665 = vdwg.mxu0
    %1666 = vmatpush.bf16.msra.mxu0 %v1104
    %1667 = vmatpush.bf16.msra.mxu0 %v1100
    %1668 = vmatpush.bf16.msra.mxu0 %v1096
    %1669 = vmatpush.bf16.msra.mxu0 %v1092
    %1670 = vmatpush.bf16.msra.mxu0 %v1088
    %1671 = vmatpush.bf16.msra.mxu0 %v1084
    %1672 = vmatpush.bf16.msra.mxu0 %v1080
    %1673 = vmatpush.bf16.msra.mxu0 %v1076
    %1674 = vmatmul.bf16.gmra.mxu0 %v148
    %v1675 = vpop.f32.mrf.mxu0
    %v1676 = vadd.f32 %v1663, %v1675
    %v1677 = vpop.f32.mrf.mxu0
    %1678 = vdwg.mxu0
    %1679 = vmatpush.bf16.msra.mxu0 %v1136
    %1680 = vmatpush.bf16.msra.mxu0 %v1132
    %1681 = vmatpush.bf16.msra.mxu0 %v1128
    %1682 = vmatpush.bf16.msra.mxu0 %v1124
    %1683 = vmatpush.bf16.msra.mxu0 %v1120
    %1684 = vmatpush.bf16.msra.mxu0 %v1116
    %1685 = vmatpush.bf16.msra.mxu0 %v1112
    %1686 = vmatpush.bf16.msra.mxu0 %v1108
    %1687 = vmatmul.bf16.gmra.mxu0 %v149
    %v1688 = vpop.f32.mrf.mxu0
    %v1689 = vadd.f32 %v1676, %v1688
    %v1690 = vpop.f32.mrf.mxu0
    %1691 = vdwg.mxu0
    %1692 = vmatpush.bf16.msra.mxu0 0
    %1693 = vmatpush.bf16.msra.mxu0 0
    %1694 = vmatpush.bf16.msra.mxu0 0
    %1695 = vmatpush.bf16.msra.mxu0 0
    %1696 = vmatpush.bf16.msra.mxu0 0
    %1697 = vmatpush.bf16.msra.mxu0 0
    %1698 = vmatpush.bf16.msra.mxu0 0
    %1699 = vmatpush.bf16.msra.mxu0 %v1140
    %1700 = vmatmul.bf16.gmra.mxu0 %v1339
    %v1701 = vpop.f32.mrf.mxu0
    %v1702 = vadd.f32 %v1689, %v1701
    %v1703 = vpop.f32.mrf.mxu0
    %1704 = vdwg.mxu0
    %v1705 = vmax.f32 %v1429, 0.0
    %v1706 = vmax.f32 %v1520, 0.0
    %v1707 = vmax.f32 %v1611, 0.0
    %v1708 = vmax.f32 %v1702, 0.0
    %v1709 = vpack.c.bf16 %v1705, %v1705
    %v1710 = vpack.c.bf16 %v1706, %v1706
    %v1711 = vpack.c.bf16 %v1707, %v1707
    %v1712 = vpack.c.bf16 %v1708, %v1708
    %v1713 = vld [vmem:[#allocation8] sm:$0xff]
    %v1714 = vld [vmem:[#allocation8 + $0x8] sm:$0xff]
    %v1715 = vld [vmem:[#allocation8 + $0x10] sm:$0xff]
    %v1716 = vld [vmem:[#allocation8 + $0x18] sm:$0xff]
    %v1717 = vld [vmem:[#allocation8 + $0x20] sm:$0xff]
    %v1718 = vld [vmem:[#allocation8 + $0x28] sm:$0xff]
    %v1719 = vld [vmem:[#allocation8 + $0x30] sm:$0xff]
    %v1720 = vld [vmem:[#allocation8 + $0x38] sm:$0xff]
    %v1721 = vld [vmem:[#allocation8 + $0x40] sm:$0xff]
    %v1722 = vld [vmem:[#allocation8 + $0x48] sm:$0xff]
    %v1723 = vld [vmem:[#allocation8 + $0x50] sm:$0xff]
    %v1724 = vld [vmem:[#allocation8 + $0x58] sm:$0xff]
    %v1725 = vld [vmem:[#allocation8 + $0x60] sm:$0xff]
    %v1726 = vld [vmem:[#allocation8 + $0x68] sm:$0xff]
    %v1727 = vld [vmem:[#allocation8 + $0x70] sm:$0xff]
    %v1728 = vld [vmem:[#allocation8 + $0x78] sm:$0xff]
    %v1729 = vld [vmem:[#allocation8 + $0x80] sm:$0xff]
    %v1730 = vld [vmem:[#allocation8 + $0x88] sm:$0xff]
    %v1731 = vld [vmem:[#allocation8 + $0x90] sm:$0xff]
    %v1732 = vld [vmem:[#allocation8 + $0x98] sm:$0xff]
    %v1733 = vld [vmem:[#allocation8 + $0xa0] sm:$0xff]
    %v1734 = vld [vmem:[#allocation8 + $0xa8] sm:$0xff]
    %v1735 = vld [vmem:[#allocation8 + $0xb0] sm:$0xff]
    %v1736 = vld [vmem:[#allocation8 + $0xb8] sm:$0xff]
    %v1737 = vld [vmem:[#allocation8 + $0xc0] sm:$0xff]
    %v1738 = vld [vmem:[#allocation8 + $0xc8] sm:$0xff]
    %v1739 = vld [vmem:[#allocation8 + $0xd0] sm:$0xff]
    %v1740 = vld [vmem:[#allocation8 + $0xd8] sm:$0xff]
    %v1741 = vld [vmem:[#allocation8 + $0xe0] sm:$0xff]
    %v1742 = vld [vmem:[#allocation8 + $0xe8] sm:$0xff]
    %v1743 = vld [vmem:[#allocation8 + $0xf0] sm:$0xff]
    %v1744 = vld [vmem:[#allocation8 + $0xf8] sm:$0xff]
    %v1745 = vld [vmem:[#allocation8 + $0x100] sm:$0xff]
    %v1746 = vld [vmem:[#allocation8 + $0x108] sm:$0xff]
    %v1747 = vld [vmem:[#allocation8 + $0x110] sm:$0xff]
    %v1748 = vld [vmem:[#allocation8 + $0x118] sm:$0xff]
    %v1749 = vld [vmem:[#allocation8 + $0x120] sm:$0xff]
    %v1750 = vld [vmem:[#allocation8 + $0x128] sm:$0xff]
    %v1751 = vld [vmem:[#allocation8 + $0x130] sm:$0xff]
    %v1752 = vld [vmem:[#allocation8 + $0x138] sm:$0xff]
    %v1753 = vld [vmem:[#allocation8 + $0x140] sm:$0xff]
    %v1754 = vld [vmem:[#allocation8 + $0x148] sm:$0xff]
    %v1755 = vld [vmem:[#allocation8 + $0x150] sm:$0xff]
    %v1756 = vld [vmem:[#allocation8 + $0x158] sm:$0xff]
    %v1757 = vld [vmem:[#allocation8 + $0x160] sm:$0xff]
    %v1758 = vld [vmem:[#allocation8 + $0x168] sm:$0xff]
    %v1759 = vld [vmem:[#allocation8 + $0x170] sm:$0xff]
    %v1760 = vld [vmem:[#allocation8 + $0x178] sm:$0xff]
    %v1761 = vld [vmem:[#allocation8 + $0x180] sm:$0xff]
    %v1762 = vld [vmem:[#allocation8 + $0x188] sm:$0xff]
    %v1763 = vld [vmem:[#allocation8 + $0x190] sm:$0xff]
    %v1764 = vld [vmem:[#allocation8 + $0x198] sm:$0xff]
    %v1765 = vld [vmem:[#allocation8 + $0x1a0] sm:$0xff]
    %v1766 = vld [vmem:[#allocation8 + $0x1a8] sm:$0xff]
    %v1767 = vld [vmem:[#allocation8 + $0x1b0] sm:$0xff]
    %v1768 = vld [vmem:[#allocation8 + $0x1b8] sm:$0xff]
    %v1769 = vld [vmem:[#allocation8 + $0x1c0] sm:$0xff]
    %v1770 = vld [vmem:[#allocation8 + $0x1c8] sm:$0xff]
    %v1771 = vld [vmem:[#allocation8 + $0x1d0] sm:$0xff]
    %v1772 = vld [vmem:[#allocation8 + $0x1d8] sm:$0xff]
    %v1773 = vld [vmem:[#allocation8 + $0x1e0] sm:$0xff]
    %v1774 = vld [vmem:[#allocation8 + $0x1e8] sm:$0xff]
    %v1775 = vld [vmem:[#allocation8 + $0x1f0] sm:$0xff]
    %v1776 = vld [vmem:[#allocation8 + $0x1f8] sm:$0xff]
    %v1777 = vld [vmem:[#allocation10] sm:$0x3]
    %v1779 = vperm.slane %v1777, 0
    %v1780 = vperm.slane %v1777, 1
    %v1847 = vunpack.c.l.b16 %v1713
    %v1848 = vunpack.c.h.b16 %v1713
    %v1849 = vunpack.c.l.b16 %v1714
    %v1850 = vunpack.c.h.b16 %v1714
    %v1851 = vunpack.c.l.b16 %v1715
    %v1852 = vunpack.c.h.b16 %v1715
    %v1853 = vunpack.c.l.b16 %v1716
    %v1854 = vunpack.c.h.b16 %v1716
    %v1855 = vunpack.c.l.b16 %v1717
    %v1856 = vunpack.c.h.b16 %v1717
    %v1857 = vunpack.c.l.b16 %v1718
    %v1858 = vunpack.c.h.b16 %v1718
    %v1859 = vunpack.c.l.b16 %v1719
    %v1860 = vunpack.c.h.b16 %v1719
    %v1861 = vunpack.c.l.b16 %v1720
    %v1862 = vunpack.c.h.b16 %v1720
    %v1863 = vunpack.c.l.b16 %v1721
    %v1864 = vunpack.c.h.b16 %v1721
    %v1865 = vunpack.c.l.b16 %v1722
    %v1866 = vunpack.c.h.b16 %v1722
    %v1867 = vunpack.c.l.b16 %v1723
    %v1868 = vunpack.c.h.b16 %v1723
    %v1869 = vunpack.c.l.b16 %v1724
    %v1870 = vunpack.c.h.b16 %v1724
    %v1871 = vunpack.c.l.b16 %v1725
    %v1872 = vunpack.c.h.b16 %v1725
    %v1873 = vunpack.c.l.b16 %v1726
    %v1874 = vunpack.c.h.b16 %v1726
    %v1875 = vunpack.c.l.b16 %v1727
    %v1876 = vunpack.c.h.b16 %v1727
    %v1877 = vunpack.c.l.b16 %v1728
    %v1878 = vunpack.c.h.b16 %v1728
    %v1879 = vunpack.c.l.b16 %v1729
    %v1880 = vunpack.c.h.b16 %v1729
    %v1881 = vunpack.c.l.b16 %v1730
    %v1882 = vunpack.c.h.b16 %v1730
    %v1883 = vunpack.c.l.b16 %v1731
    %v1884 = vunpack.c.h.b16 %v1731
    %v1885 = vunpack.c.l.b16 %v1732
    %v1886 = vunpack.c.h.b16 %v1732
    %v1887 = vunpack.c.l.b16 %v1733
    %v1888 = vunpack.c.h.b16 %v1733
    %v1889 = vunpack.c.l.b16 %v1734
    %v1890 = vunpack.c.h.b16 %v1734
    %v1891 = vunpack.c.l.b16 %v1735
    %v1892 = vunpack.c.h.b16 %v1735
    %v1893 = vunpack.c.l.b16 %v1736
    %v1894 = vunpack.c.h.b16 %v1736
    %v1895 = vunpack.c.l.b16 %v1737
    %v1896 = vunpack.c.h.b16 %v1737
    %v1897 = vunpack.c.l.b16 %v1738
    %v1898 = vunpack.c.h.b16 %v1738
    %v1899 = vunpack.c.l.b16 %v1739
    %v1900 = vunpack.c.h.b16 %v1739
    %v1901 = vunpack.c.l.b16 %v1740
    %v1902 = vunpack.c.h.b16 %v1740
    %v1903 = vunpack.c.l.b16 %v1741
    %v1904 = vunpack.c.h.b16 %v1741
    %v1905 = vunpack.c.l.b16 %v1742
    %v1906 = vunpack.c.h.b16 %v1742
    %v1907 = vunpack.c.l.b16 %v1743
    %v1908 = vunpack.c.h.b16 %v1743
    %v1909 = vunpack.c.l.b16 %v1744
    %v1910 = vunpack.c.h.b16 %v1744
    %v1911 = vunpack.c.l.b16 %v1745
    %v1912 = vunpack.c.h.b16 %v1745
    %v1913 = vunpack.c.l.b16 %v1746
    %v1914 = vunpack.c.h.b16 %v1746
    %v1915 = vunpack.c.l.b16 %v1747
    %v1916 = vunpack.c.h.b16 %v1747
    %v1917 = vunpack.c.l.b16 %v1748
    %v1918 = vunpack.c.h.b16 %v1748
    %v1919 = vunpack.c.l.b16 %v1749
    %v1920 = vunpack.c.h.b16 %v1749
    %v1921 = vunpack.c.l.b16 %v1750
    %v1922 = vunpack.c.h.b16 %v1750
    %v1923 = vunpack.c.l.b16 %v1751
    %v1924 = vunpack.c.h.b16 %v1751
    %v1925 = vunpack.c.l.b16 %v1752
    %v1926 = vunpack.c.h.b16 %v1752
    %v1927 = vunpack.c.l.b16 %v1753
    %v1928 = vunpack.c.h.b16 %v1753
    %v1929 = vunpack.c.l.b16 %v1754
    %v1930 = vunpack.c.h.b16 %v1754
    %v1931 = vunpack.c.l.b16 %v1755
    %v1932 = vunpack.c.h.b16 %v1755
    %v1933 = vunpack.c.l.b16 %v1756
    %v1934 = vunpack.c.h.b16 %v1756
    %v1935 = vunpack.c.l.b16 %v1757
    %v1936 = vunpack.c.h.b16 %v1757
    %v1937 = vunpack.c.l.b16 %v1758
    %v1938 = vunpack.c.h.b16 %v1758
    %v1939 = vunpack.c.l.b16 %v1759
    %v1940 = vunpack.c.h.b16 %v1759
    %v1941 = vunpack.c.l.b16 %v1760
    %v1942 = vunpack.c.h.b16 %v1760
    %v1943 = vunpack.c.l.b16 %v1761
    %v1944 = vunpack.c.h.b16 %v1761
    %v1945 = vunpack.c.l.b16 %v1762
    %v1946 = vunpack.c.h.b16 %v1762
    %v1947 = vunpack.c.l.b16 %v1763
    %v1948 = vunpack.c.h.b16 %v1763
    %v1949 = vunpack.c.l.b16 %v1764
    %v1950 = vunpack.c.h.b16 %v1764
    %v1951 = vunpack.c.l.b16 %v1765
    %v1952 = vunpack.c.h.b16 %v1765
    %v1953 = vunpack.c.l.b16 %v1766
    %v1954 = vunpack.c.h.b16 %v1766
    %v1955 = vunpack.c.l.b16 %v1767
    %v1956 = vunpack.c.h.b16 %v1767
    %v1957 = vunpack.c.l.b16 %v1768
    %v1958 = vunpack.c.h.b16 %v1768
    %v1959 = vunpack.c.l.b16 %v1769
    %v1960 = vunpack.c.h.b16 %v1769
    %v1961 = vunpack.c.l.b16 %v1770
    %v1962 = vunpack.c.h.b16 %v1770
    %v1963 = vunpack.c.l.b16 %v1771
    %v1964 = vunpack.c.h.b16 %v1771
    %v1965 = vunpack.c.l.b16 %v1772
    %v1966 = vunpack.c.h.b16 %v1772
    %v1967 = vunpack.c.l.b16 %v1773
    %v1968 = vunpack.c.h.b16 %v1773
    %v1969 = vunpack.c.l.b16 %v1774
    %v1970 = vunpack.c.h.b16 %v1774
    %v1971 = vunpack.c.l.b16 %v1775
    %v1972 = vunpack.c.h.b16 %v1775
    %v1973 = vunpack.c.l.b16 %v1776
    %v1974 = vunpack.c.h.b16 %v1776
    %v1975 = vpack.c.b16 %v1849, %v1847
    %v1976 = vpack.c.b16 %v1850, %v1848
    %v1977 = vpack.c.b16 %v1853, %v1851
    %v1978 = vpack.c.b16 %v1854, %v1852
    %v1979 = vpack.c.b16 %v1857, %v1855
    %v1980 = vpack.c.b16 %v1858, %v1856
    %v1981 = vpack.c.b16 %v1861, %v1859
    %v1982 = vpack.c.b16 %v1862, %v1860
    %v1983 = vpack.c.b16 %v1865, %v1863
    %v1984 = vpack.c.b16 %v1866, %v1864
    %v1985 = vpack.c.b16 %v1869, %v1867
    %v1986 = vpack.c.b16 %v1870, %v1868
    %v1987 = vpack.c.b16 %v1873, %v1871
    %v1988 = vpack.c.b16 %v1874, %v1872
    %v1989 = vpack.c.b16 %v1877, %v1875
    %v1990 = vpack.c.b16 %v1878, %v1876
    %v1991 = vpack.c.b16 %v1881, %v1879
    %v1992 = vpack.c.b16 %v1882, %v1880
    %v1993 = vpack.c.b16 %v1885, %v1883
    %v1994 = vpack.c.b16 %v1886, %v1884
    %v1995 = vpack.c.b16 %v1889, %v1887
    %v1996 = vpack.c.b16 %v1890, %v1888
    %v1997 = vpack.c.b16 %v1893, %v1891
    %v1998 = vpack.c.b16 %v1894, %v1892
    %v1999 = vpack.c.b16 %v1897, %v1895
    %v2000 = vpack.c.b16 %v1898, %v1896
    %v2001 = vpack.c.b16 %v1901, %v1899
    %v2002 = vpack.c.b16 %v1902, %v1900
    %v2003 = vpack.c.b16 %v1905, %v1903
    %v2004 = vpack.c.b16 %v1906, %v1904
    %v2005 = vpack.c.b16 %v1909, %v1907
    %v2006 = vpack.c.b16 %v1910, %v1908
    %v2007 = vpack.c.b16 %v1913, %v1911
    %v2008 = vpack.c.b16 %v1914, %v1912
    %v2009 = vpack.c.b16 %v1917, %v1915
    %v2010 = vpack.c.b16 %v1918, %v1916
    %v2011 = vpack.c.b16 %v1921, %v1919
    %v2012 = vpack.c.b16 %v1922, %v1920
    %v2013 = vpack.c.b16 %v1925, %v1923
    %v2014 = vpack.c.b16 %v1926, %v1924
    %v2015 = vpack.c.b16 %v1929, %v1927
    %v2016 = vpack.c.b16 %v1930, %v1928
    %v2017 = vpack.c.b16 %v1933, %v1931
    %v2018 = vpack.c.b16 %v1934, %v1932
    %v2019 = vpack.c.b16 %v1937, %v1935
    %v2020 = vpack.c.b16 %v1938, %v1936
    %v2021 = vpack.c.b16 %v1941, %v1939
    %v2022 = vpack.c.b16 %v1942, %v1940
    %v2023 = vpack.c.b16 %v1945, %v1943
    %v2024 = vpack.c.b16 %v1946, %v1944
    %v2025 = vpack.c.b16 %v1949, %v1947
    %v2026 = vpack.c.b16 %v1950, %v1948
    %v2027 = vpack.c.b16 %v1953, %v1951
    %v2028 = vpack.c.b16 %v1954, %v1952
    %v2029 = vpack.c.b16 %v1957, %v1955
    %v2030 = vpack.c.b16 %v1958, %v1956
    %v2031 = vpack.c.b16 %v1961, %v1959
    %v2032 = vpack.c.b16 %v1962, %v1960
    %v2033 = vpack.c.b16 %v1965, %v1963
    %v2034 = vpack.c.b16 %v1966, %v1964
    %v2035 = vpack.c.b16 %v1969, %v1967
    %v2036 = vpack.c.b16 %v1970, %v1968
    %v2037 = vpack.c.b16 %v1973, %v1971
    %v2038 = vpack.c.b16 %v1974, %v1972
    %2103 = vmatpush.bf16.msra.mxu0 %v1989
    %2104 = vmatpush.bf16.msra.mxu0 %v1987
    %2105 = vmatpush.bf16.msra.mxu0 %v1985
    %2106 = vmatpush.bf16.msra.mxu0 %v1983
    %2107 = vmatpush.bf16.msra.mxu0 %v1981
    %2108 = vmatpush.bf16.msra.mxu0 %v1979
    %2109 = vmatpush.bf16.msra.mxu0 %v1977
    %2110 = vmatpush.bf16.msra.mxu0 %v1975
    %2111 = vmatmul.bf16.gmra.mxu0 %v1709
    %v2112 = vpop.f32.mrf.mxu0
    %v2113 = vadd.f32 %v1779, %v2112
    %v2114 = vpop.f32.mrf.mxu0
    %2115 = vdwg.mxu0
    %2116 = vmatpush.bf16.msra.mxu0 %v2005
    %2117 = vmatpush.bf16.msra.mxu0 %v2003
    %2118 = vmatpush.bf16.msra.mxu0 %v2001
    %2119 = vmatpush.bf16.msra.mxu0 %v1999
    %2120 = vmatpush.bf16.msra.mxu0 %v1997
    %2121 = vmatpush.bf16.msra.mxu0 %v1995
    %2122 = vmatpush.bf16.msra.mxu0 %v1993
    %2123 = vmatpush.bf16.msra.mxu0 %v1991
    %2124 = vmatmul.bf16.gmra.mxu0 %v1710
    %v2125 = vpop.f32.mrf.mxu0
    %v2126 = vadd.f32 %v2113, %v2125
    %v2127 = vpop.f32.mrf.mxu0
    %2128 = vdwg.mxu0
    %2129 = vmatpush.bf16.msra.mxu0 %v2021
    %2130 = vmatpush.bf16.msra.mxu0 %v2019
    %2131 = vmatpush.bf16.msra.mxu0 %v2017
    %2132 = vmatpush.bf16.msra.mxu0 %v2015
    %2133 = vmatpush.bf16.msra.mxu0 %v2013
    %2134 = vmatpush.bf16.msra.mxu0 %v2011
    %2135 = vmatpush.bf16.msra.mxu0 %v2009
    %2136 = vmatpush.bf16.msra.mxu0 %v2007
    %2137 = vmatmul.bf16.gmra.mxu0 %v1711
    %v2138 = vpop.f32.mrf.mxu0
    %v2139 = vadd.f32 %v2126, %v2138
    %v2140 = vpop.f32.mrf.mxu0
    %2141 = vdwg.mxu0
    %2142 = vmatpush.bf16.msra.mxu0 %v2037
    %2143 = vmatpush.bf16.msra.mxu0 %v2035
    %2144 = vmatpush.bf16.msra.mxu0 %v2033
    %2145 = vmatpush.bf16.msra.mxu0 %v2031
    %2146 = vmatpush.bf16.msra.mxu0 %v2029
    %2147 = vmatpush.bf16.msra.mxu0 %v2027
    %2148 = vmatpush.bf16.msra.mxu0 %v2025
    %2149 = vmatpush.bf16.msra.mxu0 %v2023
    %2150 = vmatmul.bf16.gmra.mxu0 %v1712
    %v2151 = vpop.f32.mrf.mxu0
    %v2152 = vadd.f32 %v2139, %v2151
    %v2153 = vpop.f32.mrf.mxu0
    %2154 = vdwg.mxu0
    %2155 = vmatpush.bf16.msra.mxu0 %v1990
    %2156 = vmatpush.bf16.msra.mxu0 %v1988
    %2157 = vmatpush.bf16.msra.mxu0 %v1986
    %2158 = vmatpush.bf16.msra.mxu0 %v1984
    %2159 = vmatpush.bf16.msra.mxu0 %v1982
    %2160 = vmatpush.bf16.msra.mxu0 %v1980
    %2161 = vmatpush.bf16.msra.mxu0 %v1978
    %2162 = vmatpush.bf16.msra.mxu0 %v1976
    %2163 = vmatmul.bf16.gmra.mxu0 %v1709
    %v2164 = vpop.f32.mrf.mxu0
    %v2165 = vadd.f32 %v1780, %v2164
    %v2166 = vpop.f32.mrf.mxu0
    %2167 = vdwg.mxu0
    %2168 = vmatpush.bf16.msra.mxu0 %v2006
    %2169 = vmatpush.bf16.msra.mxu0 %v2004
    %2170 = vmatpush.bf16.msra.mxu0 %v2002
    %2171 = vmatpush.bf16.msra.mxu0 %v2000
    %2172 = vmatpush.bf16.msra.mxu0 %v1998
    %2173 = vmatpush.bf16.msra.mxu0 %v1996
    %2174 = vmatpush.bf16.msra.mxu0 %v1994
    %2175 = vmatpush.bf16.msra.mxu0 %v1992
    %2176 = vmatmul.bf16.gmra.mxu0 %v1710
    %v2177 = vpop.f32.mrf.mxu0
    %v2178 = vadd.f32 %v2165, %v2177
    %v2179 = vpop.f32.mrf.mxu0
    %2180 = vdwg.mxu0
    %2181 = vmatpush.bf16.msra.mxu0 %v2022
    %2182 = vmatpush.bf16.msra.mxu0 %v2020
    %2183 = vmatpush.bf16.msra.mxu0 %v2018
    %2184 = vmatpush.bf16.msra.mxu0 %v2016
    %2185 = vmatpush.bf16.msra.mxu0 %v2014
    %2186 = vmatpush.bf16.msra.mxu0 %v2012
    %2187 = vmatpush.bf16.msra.mxu0 %v2010
    %2188 = vmatpush.bf16.msra.mxu0 %v2008
    %2189 = vmatmul.bf16.gmra.mxu0 %v1711
    %v2190 = vpop.f32.mrf.mxu0
    %v2191 = vadd.f32 %v2178, %v2190
    %v2192 = vpop.f32.mrf.mxu0
    %2193 = vdwg.mxu0
    %2194 = vmatpush.bf16.msra.mxu0 %v2038
    %2195 = vmatpush.bf16.msra.mxu0 %v2036
    %2196 = vmatpush.bf16.msra.mxu0 %v2034
    %2197 = vmatpush.bf16.msra.mxu0 %v2032
    %2198 = vmatpush.bf16.msra.mxu0 %v2030
    %2199 = vmatpush.bf16.msra.mxu0 %v2028
    %2200 = vmatpush.bf16.msra.mxu0 %v2026
    %2201 = vmatpush.bf16.msra.mxu0 %v2024
    %2202 = vmatmul.bf16.gmra.mxu0 %v1712
    %v2203 = vpop.f32.mrf.mxu0
    %v2204 = vadd.f32 %v2191, %v2203
    %v2205 = vpop.f32.mrf.mxu0
    %2206 = vdwg.mxu0
    %v2207 = vmax.f32 %v2152, 0.0
    %v2208 = vmax.f32 %v2204, 0.0
    %v2209 = vpack.c.bf16 %v2207, %v2207
    %v2210 = vpack.c.bf16 %v2208, %v2208
    %v2211 = vld [vmem:[#allocation11] sm:$0xf]
    %v2212 = vld [vmem:[#allocation11 + $0x4] sm:$0xf]
    %v2213 = vld [vmem:[#allocation11 + $0x8] sm:$0xf]
    %v2214 = vld [vmem:[#allocation11 + $0xc] sm:$0xf]
    %v2215 = vld [vmem:[#allocation11 + $0x10] sm:$0xf]
    %v2216 = vld [vmem:[#allocation11 + $0x14] sm:$0xf]
    %v2217 = vld [vmem:[#allocation11 + $0x18] sm:$0xf]
    %v2218 = vld [vmem:[#allocation11 + $0x1c] sm:$0xf]
    %v2219 = vld [vmem:[#allocation11 + $0x20] sm:$0xf]
    %v2220 = vld [vmem:[#allocation11 + $0x24] sm:$0xf]
    %v2221 = vld [vmem:[#allocation11 + $0x28] sm:$0xf]
    %v2222 = vld [vmem:[#allocation11 + $0x2c] sm:$0xf]
    %v2223 = vld [vmem:[#allocation11 + $0x30] sm:$0xf]
    %v2224 = vld [vmem:[#allocation11 + $0x34] sm:$0xf]
    %v2225 = vld [vmem:[#allocation11 + $0x38] sm:$0xf]
    %v2226 = vld [vmem:[#allocation11 + $0x3c] sm:$0xf]
    %v2227 = vld [vmem:[#allocation11 + $0x40] sm:$0xf]
    %v2228 = vld [vmem:[#allocation11 + $0x44] sm:$0xf]
    %v2229 = vld [vmem:[#allocation11 + $0x48] sm:$0xf]
    %v2230 = vld [vmem:[#allocation11 + $0x4c] sm:$0xf]
    %v2231 = vld [vmem:[#allocation11 + $0x50] sm:$0xf]
    %v2232 = vld [vmem:[#allocation11 + $0x54] sm:$0xf]
    %v2233 = vld [vmem:[#allocation11 + $0x58] sm:$0xf]
    %v2234 = vld [vmem:[#allocation11 + $0x5c] sm:$0xf]
    %v2235 = vld [vmem:[#allocation11 + $0x60] sm:$0xf]
    %v2236 = vld [vmem:[#allocation11 + $0x64] sm:$0xf]
    %v2237 = vld [vmem:[#allocation11 + $0x68] sm:$0xf]
    %v2238 = vld [vmem:[#allocation11 + $0x6c] sm:$0xf]
    %v2239 = vld [vmem:[#allocation11 + $0x70] sm:$0xf]
    %v2240 = vld [vmem:[#allocation11 + $0x74] sm:$0xf]
    %v2241 = vld [vmem:[#allocation11 + $0x78] sm:$0xf]
    %v2242 = vld [vmem:[#allocation11 + $0x7c] sm:$0xf]
    %v2243 = vld [vmem:[%s6] sm:$0x1]
    %v2245 = vperm.slane %v2243, 0
    %v2279 = vunpack.c.l.b16 %v2211
    %v2280 = vunpack.c.l.b16 %v2212
    %v2281 = vunpack.c.l.b16 %v2213
    %v2282 = vunpack.c.l.b16 %v2214
    %v2283 = vunpack.c.l.b16 %v2215
    %v2284 = vunpack.c.l.b16 %v2216
    %v2285 = vunpack.c.l.b16 %v2217
    %v2286 = vunpack.c.l.b16 %v2218
    %v2287 = vunpack.c.l.b16 %v2219
    %v2288 = vunpack.c.l.b16 %v2220
    %v2289 = vunpack.c.l.b16 %v2221
    %v2290 = vunpack.c.l.b16 %v2222
    %v2291 = vunpack.c.l.b16 %v2223
    %v2292 = vunpack.c.l.b16 %v2224
    %v2293 = vunpack.c.l.b16 %v2225
    %v2294 = vunpack.c.l.b16 %v2226
    %v2295 = vunpack.c.l.b16 %v2227
    %v2296 = vunpack.c.l.b16 %v2228
    %v2297 = vunpack.c.l.b16 %v2229
    %v2298 = vunpack.c.l.b16 %v2230
    %v2299 = vunpack.c.l.b16 %v2231
    %v2300 = vunpack.c.l.b16 %v2232
    %v2301 = vunpack.c.l.b16 %v2233
    %v2302 = vunpack.c.l.b16 %v2234
    %v2303 = vunpack.c.l.b16 %v2235
    %v2304 = vunpack.c.l.b16 %v2236
    %v2305 = vunpack.c.l.b16 %v2237
    %v2306 = vunpack.c.l.b16 %v2238
    %v2307 = vunpack.c.l.b16 %v2239
    %v2308 = vunpack.c.l.b16 %v2240
    %v2309 = vunpack.c.l.b16 %v2241
    %v2310 = vunpack.c.l.b16 %v2242
    %v2311 = vpack.c.b16 %v2280, %v2279
    %v2312 = vpack.c.b16 %v2282, %v2281
    %v2313 = vpack.c.b16 %v2284, %v2283
    %v2314 = vpack.c.b16 %v2286, %v2285
    %v2315 = vpack.c.b16 %v2288, %v2287
    %v2316 = vpack.c.b16 %v2290, %v2289
    %v2317 = vpack.c.b16 %v2292, %v2291
    %v2318 = vpack.c.b16 %v2294, %v2293
    %v2319 = vpack.c.b16 %v2296, %v2295
    %v2320 = vpack.c.b16 %v2298, %v2297
    %v2321 = vpack.c.b16 %v2300, %v2299
    %v2322 = vpack.c.b16 %v2302, %v2301
    %v2323 = vpack.c.b16 %v2304, %v2303
    %v2324 = vpack.c.b16 %v2306, %v2305
    %v2325 = vpack.c.b16 %v2308, %v2307
    %v2326 = vpack.c.b16 %v2310, %v2309
    %2343 = vmatpush.bf16.msra.mxu0 %v2318
    %2344 = vmatpush.bf16.msra.mxu0 %v2317
    %2345 = vmatpush.bf16.msra.mxu0 %v2316
    %2346 = vmatpush.bf16.msra.mxu0 %v2315
    %2347 = vmatpush.bf16.msra.mxu0 %v2314
    %2348 = vmatpush.bf16.msra.mxu0 %v2313
    %2349 = vmatpush.bf16.msra.mxu0 %v2312
    %2350 = vmatpush.bf16.msra.mxu0 %v2311
    %2351 = vmatmul.bf16.gmra.mxu0 %v2209
    %v2352 = vpop.f32.mrf.mxu0
    %v2353 = vadd.f32 %v2245, %v2352
    %v2354 = vpop.f32.mrf.mxu0
    %2355 = vdwg.mxu0
    %2356 = vmatpush.bf16.msra.mxu0 %v2326
    %2357 = vmatpush.bf16.msra.mxu0 %v2325
    %2358 = vmatpush.bf16.msra.mxu0 %v2324
    %2359 = vmatpush.bf16.msra.mxu0 %v2323
    %2360 = vmatpush.bf16.msra.mxu0 %v2322
    %2361 = vmatpush.bf16.msra.mxu0 %v2321
    %2362 = vmatpush.bf16.msra.mxu0 %v2320
    %2363 = vmatpush.bf16.msra.mxu0 %v2319
    %2364 = vmatmul.bf16.gmra.mxu0 %v2210
    %v2365 = vpop.f32.mrf.mxu0
    %v2366 = vadd.f32 %v2353, %v2365
    %v2367 = vpop.f32.mrf.mxu0
    %2368 = vdwg.mxu0
    %v2369 = vmax.f32 %v2366, 0.0
    %v2370 = vpack.c.bf16 %v2369, %v2369
    %v2371 = vld [vmem:[#allocation13] sm:$0xf]
    %v2372 = vld [vmem:[#allocation13 + $0x4] sm:$0xf]
    %v2373 = vld [vmem:[#allocation13 + $0x8] sm:$0xf]
    %v2374 = vld [vmem:[#allocation13 + $0xc] sm:$0xf]
    %v2375 = vld [vmem:[#allocation13 + $0x10] sm:$0xf]
    %v2376 = vld [vmem:[#allocation13 + $0x14] sm:$0xf]
    %v2377 = vld [vmem:[#allocation13 + $0x18] sm:$0xf]
    %v2378 = vld [vmem:[#allocation13 + $0x1c] sm:$0xf]
    %v2379 = vld [vmem:[#allocation13 + $0x20] sm:$0xf]
    %v2380 = vld [vmem:[#allocation13 + $0x24] sm:$0xf]
    %v2381 = vld [vmem:[#allocation13 + $0x28] sm:$0xf]
    %v2382 = vld [vmem:[#allocation13 + $0x2c] sm:$0xf]
    %v2383 = vld [vmem:[#allocation13 + $0x30] sm:$0xf]
    %v2384 = vld [vmem:[#allocation13 + $0x34] sm:$0xf]
    %v2385 = vld [vmem:[#allocation13 + $0x38] sm:$0xf]
    %v2386 = vld [vmem:[#allocation13 + $0x3c] sm:$0xf]
    %v2387 = vld [vmem:[%s8] sm:$0x1]
    %v2389 = vperm.slane %v2387, 0
    %v2407 = vunpack.c.l.b16 %v2371
    %v2408 = vunpack.c.l.b16 %v2372
    %v2409 = vunpack.c.l.b16 %v2373
    %v2410 = vunpack.c.l.b16 %v2374
    %v2411 = vunpack.c.l.b16 %v2375
    %v2412 = vunpack.c.l.b16 %v2376
    %v2413 = vunpack.c.l.b16 %v2377
    %v2414 = vunpack.c.l.b16 %v2378
    %v2415 = vunpack.c.l.b16 %v2379
    %v2416 = vunpack.c.l.b16 %v2380
    %v2417 = vunpack.c.l.b16 %v2381
    %v2418 = vunpack.c.l.b16 %v2382
    %v2419 = vunpack.c.l.b16 %v2383
    %v2420 = vunpack.c.l.b16 %v2384
    %v2421 = vunpack.c.l.b16 %v2385
    %v2422 = vunpack.c.l.b16 %v2386
    %v2423 = vpack.c.b16 %v2408, %v2407
    %v2424 = vpack.c.b16 %v2410, %v2409
    %v2425 = vpack.c.b16 %v2412, %v2411
    %v2426 = vpack.c.b16 %v2414, %v2413
    %v2427 = vpack.c.b16 %v2416, %v2415
    %v2428 = vpack.c.b16 %v2418, %v2417
    %v2429 = vpack.c.b16 %v2420, %v2419
    %v2430 = vpack.c.b16 %v2422, %v2421
    %2439 = vmatpush.bf16.msra.mxu0 %v2430
    %2440 = vmatpush.bf16.msra.mxu0 %v2429
    %2441 = vmatpush.bf16.msra.mxu0 %v2428
    %2442 = vmatpush.bf16.msra.mxu0 %v2427
    %2443 = vmatpush.bf16.msra.mxu0 %v2426
    %2444 = vmatpush.bf16.msra.mxu0 %v2425
    %2445 = vmatpush.bf16.msra.mxu0 %v2424
    %2446 = vmatpush.bf16.msra.mxu0 %v2423
    %2447 = vmatmul.bf16.gmra.mxu0 %v2370
    %v2448 = vpop.f32.mrf.mxu0
    %v2449 = vadd.f32 %v2389, %v2448
    %v2450 = vpop.f32.mrf.mxu0
    %2451 = vdwg.mxu0
    %2452 = vst [vmem:[#allocation14] sm:$0xff] %v2449
    // Predicated region
    $region66: #{simple_nn_forward.1} parent=1 // pred_check
      _
    $region67: #{simple_nn_forward.1} parent=1 // pred_check_branch
      %2454 = sbr.rel (0) target = $region69
    $region68: #{simple_nn_forward.1} parent=1 // pred_region
      %2456 = vsyncadd [#allocation4], 0
      %s2458 = sshll.u32 [#allocation14], 4
      %s2459 = int_to_ptr.vmem [resolvable:$true] %s2458
      %s2460 = sshll.u32 %s9, 4
      %s2461 = int_to_ptr.hbm [resolvable:$true] %s2460
      %2463 = dma.vmem_to_hbm [thread:$0]  %s2459, 128, %s2461, [#allocation4]
    $region69: #{simple_nn_forward.1} parent=1 // pred_fallthru
      _
    // Predicated region
    $region70: #{simple_nn_forward.1} parent=1 // pred_check
      _
    $region71: #{simple_nn_forward.1} parent=1 // pred_check_branch
      %2465 = sbr.rel (0) target = $region73
    $region72: #{simple_nn_forward.1} parent=1 // pred_region
      %2467 = dma.done [#allocation4], 128
    $region73: #{simple_nn_forward.1} parent=1 // pred_fallthru
      _
    %2468 = vsyncpa [#allocation3], 1
    %2469 = vsyncpa [#allocation6], 1
    %2470 = vsyncpa [#allocation9], 1
    %2471 = vsyncpa [#allocation12], 1
    %2472 = vsyncpa [#allocation4], 1

</llo_original>
